<compile_context>
chip_gen: v7x
topology: tpu7x:2x2x1
jax: 0.10.0
libtpu: 0.0.40
codegen_flags: <defaults>
</compile_context>

<pallas_src>
import functools

import jax
import jax.numpy as jnp
from jax import lax
from jax.experimental import pallas as pl
from jax.experimental.pallas import tpu as pltpu

LANE = 128
SUB = 8                    # sublane height of the resident accumulators
NUM_PAR = 2                # leading "parallel" grid blocks
ROW_ALIGN = 32             # row-tile alignment (covers f32/bf16/int8 tiling)
TM_MAX = 4096              # max row tile: 4096*128*4B = 2 MiB per f32 block
CHUNK_ROWS = 512           # in-kernel compute sub-chunk (bounds temporaries)
SMALL_FAST_PATH_ELEMS = 65536
VMEM_LIMIT_BYTES = 32 * 1024 * 1024


def _round_up(x, m):
    return ((x + m - 1) // m) * m


def _cdiv(a, b):
    return -(-a // b)


def _pow(x, n):
    """x**n as pure VPU multiplies when n is a positive Python int."""
    if isinstance(n, int) and n >= 1:
        result = None
        base = x
        while n:
            if n & 1:
                result = base if result is None else result * base
            n >>= 1
            if n:
                base = base * base
        return result
    return x ** n


def _focal_elem(pred, gt, mask, alpha, beta):
    """Per-element fused loss term and positive indicator (f32)."""
    is_pos = gt == 1.0
    one_m_pred = 1.0 - pred
    # pos/neg sites are disjoint -> a single transcendental per element.
    log_term = jnp.log(jnp.where(is_pos, pred, one_m_pred))
    w = jnp.where(is_pos,
                  _pow(one_m_pred, alpha),
                  _pow(pred, alpha) * _pow(1.0 - gt, beta))
    # gt > 1 sites are neither pos nor neg in the reference -> exclude them.
    valid = (gt <= 1.0).astype(jnp.float32)
    pos_inds = is_pos.astype(jnp.float32)
    if mask is not None:
        valid = valid * mask
        pos_inds = pos_inds * mask
    loss = log_term * w * valid
    return loss, pos_inds


def _fold(x):
    """(chunk, 128) -> (8, 128) partial sums via VALU adds only (no XLU)."""
    rows = x.shape[0]
    return x.reshape(rows // SUB, SUB, LANE).sum(axis=0)


def _focal_body(pred_ref, gt_ref, mask_ref, out_ref, alpha, beta, chunk):
    @pl.when(pl.program_id(1) == 0)
    def _():
        out_ref[...] = jnp.zeros_like(out_ref)

    n_chunks = pred_ref.shape[0] // chunk

    def step(c, carry):
        loss_acc, npos_acc = carry
        start = pl.multiple_of(c * chunk, chunk)
        pred = pred_ref[pl.ds(start, chunk), :].astype(jnp.float32)
        gt = gt_ref[pl.ds(start, chunk), :].astype(jnp.float32)
        m = None
        if mask_ref is not None:
            m = mask_ref[pl.ds(start, chunk), :].astype(jnp.float32)
        loss_e, pos_e = _focal_elem(pred, gt, m, alpha, beta)
        return loss_acc + _fold(loss_e), npos_acc + _fold(pos_e)

    init = (jnp.zeros((SUB, LANE), jnp.float32),
            jnp.zeros((SUB, LANE), jnp.float32))
    if n_chunks == 1:
        loss_acc, npos_acc = step(0, init)
    else:
        loss_acc, npos_acc = lax.fori_loop(0, n_chunks, step, init,
                                           unroll=True)

    out_ref[pl.ds(0, SUB), :] += loss_acc
    out_ref[pl.ds(SUB, SUB), :] += npos_acc


def _focal_kernel(pred_ref, gt_ref, out_ref, *, alpha, beta, chunk):
    _focal_body(pred_ref, gt_ref, None, out_ref, alpha, beta, chunk)


def _focal_kernel_masked(pred_ref, gt_ref, mask_ref, out_ref, *, alpha, beta,
                         chunk):
    _focal_body(pred_ref, gt_ref, mask_ref, out_ref, alpha, beta, chunk)


def _loss_small(pred, gt, mask, alpha, beta):
    """Plain-JAX path for tiny inputs (pallas_call overhead dominates)."""
    pred = pred.astype(jnp.float32)
    gt = gt.astype(jnp.float32)
    pos_inds = (gt == 1.0).astype(jnp.float32)
    neg_inds = (gt < 1.0).astype(jnp.float32)
    if mask is not None:
        m = jnp.broadcast_to(mask, pred.shape).astype(jnp.float32)
        pos_inds = pos_inds * m
        neg_inds = neg_inds * m
    pos_loss = jnp.sum(jnp.log(pred) * _pow(1.0 - pred, alpha) * pos_inds)
    neg_loss = jnp.sum(jnp.log(1.0 - pred) * _pow(pred, alpha) *
                       _pow(1.0 - gt, beta) * neg_inds)
    num_pos = jnp.sum(pos_inds)
    safe = jnp.where(num_pos == 0, 1.0, num_pos)
    return jnp.where(num_pos == 0, -neg_loss, -(pos_loss + neg_loss) / safe)


def _native_float(x):
    """Stream f32/bf16 natively; everything else is upcast to f32."""
    if x.dtype == jnp.float32 or x.dtype == jnp.bfloat16:
        return x
    return x.astype(jnp.float32)


def focal_heatmap_loss(pred, gt, mask=None, *, alpha=2, beta=4):
    """JAX/Pallas equivalent of FocalHeatmapLoss.forward (returns scalar)."""
    assert pred.shape == gt.shape
    total = pred.size

    if total <= SMALL_FAST_PATH_ELEMS:
        return _loss_small(pred, gt, mask, alpha, beta)

    pred = _native_float(pred)
    gt = _native_float(gt)

    rows = _cdiv(total, LANE)

    # Tile selection: pad rows up instead of shrinking the tile.  tm is a
    # multiple of ROW_ALIGN and of the in-kernel sub-chunk size.
    n_tiles = _round_up(max(NUM_PAR, _cdiv(rows, TM_MAX)), NUM_PAR)
    tm = _round_up(_cdiv(rows, n_tiles), ROW_ALIGN)
    if tm <= CHUNK_ROWS:
        chunk = tm
    else:
        n_chunks = _cdiv(tm, CHUNK_ROWS)
        chunk = _round_up(_cdiv(tm, n_chunks), ROW_ALIGN)
        tm = n_chunks * chunk
    padded_rows = n_tiles * tm
    tiles_per_block = n_tiles // NUM_PAR

    def to_slab(x):
        x = x.reshape(-1)
        pad = padded_rows * LANE - x.size
        if pad:
            # zero padding: gt=0, pred=0 -> log(1-0)=0, pred**a=0, pos_inds=0,
            # so padded elements contribute exactly 0 to both sums.
            x = jnp.pad(x, (0, pad))
        return x.reshape(padded_rows, LANE)

    pred2 = to_slab(pred)
    gt2 = to_slab(gt)

    data_spec = pl.BlockSpec((tm, LANE),
                             lambda c, i: (c * tiles_per_block + i, 0))
    out_spec = pl.BlockSpec((2 * SUB, LANE), lambda c, i: (c, 0))
    out_shape = jax.ShapeDtypeStruct((NUM_PAR * 2 * SUB, LANE), jnp.float32)

    if mask is None:
        kernel = functools.partial(_focal_kernel, alpha=alpha, beta=beta,
                                   chunk=chunk)
        in_specs = [data_spec, data_spec]
        operands = (pred2, gt2)
    else:
        # TODO(synk): stream small broadcastable masks with their own tiny
        # BlockSpec instead of materializing a pred-sized array.
        m = jnp.broadcast_to(jnp.asarray(mask), pred.shape)
        if m.dtype == jnp.float32 or m.dtype == jnp.bfloat16:
            pass                                   # stream natively
        elif jnp.issubdtype(m.dtype, jnp.floating):
            m = m.astype(jnp.float32)              # exact for other floats
        else:
            m = m.astype(jnp.bfloat16)             # bool/int: 0/1 exact, 1/2 bytes
        mask2 = to_slab(m)
        kernel = functools.partial(_focal_kernel_masked, alpha=alpha,
                                   beta=beta, chunk=chunk)
        in_specs = [data_spec, data_spec, data_spec]
        operands = (pred2, gt2, mask2)

    out = pl.pallas_call(
        kernel,
        out_shape=out_shape,
        grid_spec=pltpu.PrefetchScalarGridSpec(
            num_scalar_prefetch=0,
            grid=(NUM_PAR, tiles_per_block),
            in_specs=in_specs,
            out_specs=out_spec,
        ),
        compiler_params=pltpu.CompilerParams(
            dimension_semantics=("parallel", "arbitrary"),
            vmem_limit_bytes=VMEM_LIMIT_BYTES),
    )(*operands)

    # Tiny final reduction (2 x 2 x 8 x 128 floats) in plain JAX.
    out = out.reshape(NUM_PAR, 2, SUB, LANE)
    loss_sum = jnp.sum(out[:, 0])
    num_pos = jnp.sum(out[:, 1])

    safe_num = jnp.where(num_pos == 0, 1.0, num_pos)
    # pos contributions are identically 0 when num_pos == 0, so -loss_sum
    # equals the reference's -neg_loss branch.
    return jnp.where(num_pos == 0, -loss_sum, -loss_sum / safe_num)


def _reference_loss(pred, gt, mask=None, alpha=2, beta=4):
    """Literal translation of the torch module (oracle for testing)."""
    pred = pred.astype(jnp.float32)
    gt = gt.astype(jnp.float32)
    pos_inds = (gt == 1.0).astype(jnp.float32)
    neg_inds = (gt < 1.0).astype(jnp.float32)
    if mask is not None:
        m = jnp.broadcast_to(mask, pred.shape).astype(jnp.float32)
        pos_inds = pos_inds * m
        neg_inds = neg_inds * m
    neg_weights = (1.0 - gt) ** beta
    pos_loss = jnp.sum(jnp.log(pred) * (1.0 - pred) ** alpha * pos_inds)
    neg_loss = jnp.sum(jnp.log(1.0 - pred) * pred ** alpha * neg_weights *
                       neg_inds)
    num_pos = jnp.sum(pos_inds)
    safe = jnp.where(num_pos == 0, 1.0, num_pos)
    return jnp.where(num_pos == 0, -neg_loss, -(pos_loss + neg_loss) / safe)


if __name__ == "__main__":
    key = jax.random.PRNGKey(0)
    k1, k2, k3 = jax.random.split(key, 3)

    # ---- Pallas kernel path (2*17*64*64 = 139,264 elems > fast-path cut) ----
    B, C, H, W = 2, 17, 64, 64
    pred = jax.nn.sigmoid(jax.random.normal(k1, (B, C, H, W), jnp.float32))
    gt = jax.random.uniform(k2, (B, C, H, W), jnp.float32, 0.0, 0.99)
    gt = gt.at[:, :, 13, 41].set(1.0).at[:, :, 50, 7].set(1.0)

    loss = jax.block_until_ready(focal_heatmap_loss(pred, gt))
    ref = _reference_loss(pred, gt)
    assert jnp.allclose(loss, ref, rtol=2e-4, atol=1e-3), (loss, ref)

    mask_f = (jax.random.uniform(k3, (B, C, H, W)) > 0.3).astype(jnp.float32)
    loss_m = jax.block_until_ready(focal_heatmap_loss(pred, gt, mask_f))
    ref_m = _reference_loss(pred, gt, mask_f)
    assert jnp.allclose(loss_m, ref_m, rtol=2e-4, atol=1e-3), (loss_m, ref_m)

    mask_b = jax.random.uniform(k3, (B, C, H, W)) > 0.5   # bool -> bf16 stream
    loss_b = jax.block_until_ready(focal_heatmap_loss(pred, gt, mask_b))
    ref_b = _reference_loss(pred, gt, mask_b.astype(jnp.float32))
    assert jnp.allclose(loss_b, ref_b, rtol=2e-4, atol=1e-3), (loss_b, ref_b)

    # ---- small-input fast path (2*4*16*16 = 2,048 elements) ----
    ps = jax.nn.sigmoid(jax.random.normal(k1, (2, 4, 16, 16), jnp.float32))
    gs = jax.random.uniform(k2, (2, 4, 16, 16), jnp.float32, 0.0, 0.99)
    gs = gs.at[:, :, 4, 7].set(1.0)
    ls = jax.block_until_ready(focal_heatmap_loss(ps, gs))
    rs = _reference_loss(ps, gs)
    assert jnp.allclose(ls, rs, rtol=1e-5, atol=1e-5), (ls, rs)

    print("KERNEL_OK")
</pallas_src>

<mosaic_0001>
module attributes {stable_mosaic.version = 11 : i64} {
  func.func @_focal_kernel(%arg0: i32, %arg1: i32, %arg2: memref<576x128xf32, #tpu.memory_space<vmem>>, %arg3: memref<576x128xf32, #tpu.memory_space<vmem>>, %arg4: memref<16x128xf32, #tpu.memory_space<vmem>>) attributes {dimension_semantics = [#tpu.dimension_semantics<parallel>, #tpu.dimension_semantics<arbitrary>], iteration_bounds = array<i64: 2, 1>, scalar_prefetch = 0 : i64, scratch_operands = 0 : i64, tpu.core_type = #tpu.core_type<tc>, window_params = [{transform_indices = @transform_0, window_bounds = array<i64: 576, 128>}, {transform_indices = @transform_1, window_bounds = array<i64: 576, 128>}, {transform_indices = @transform_2, window_bounds = array<i64: 16, 128>}]} {
    %c0_i32 = arith.constant 0 : i32
    %0 = arith.cmpi eq, %arg1, %c0_i32 : i32
    %1 = arith.extui %0 : i1 to i32
    %c0_i32_0 = arith.constant 0 : i32
    %2 = arith.cmpi ne, %1, %c0_i32_0 : i32
    scf.if %2 {
      %cst_26 = arith.constant 0.000000e+00 : f32
      %79 = vector.broadcast %cst_26 : f32 to vector<16x128xf32>
      %c0_27 = arith.constant 0 : index
      %c0_28 = arith.constant 0 : index
      %80 = vector.load %arg4[%c0_27, %c0_28] : memref<16x128xf32, #tpu.memory_space<vmem>>, vector<16x128xf32>
      tpu.vector_store %arg4[%c0_27, %c0_28], %79 {strides = array<i32>} : memref<16x128xf32, #tpu.memory_space<vmem>>, vector<16x128xf32>,
    } else {
    }
    %cst = arith.constant 0.000000e+00 : f32
    %3 = vector.broadcast %cst : f32 to vector<8x128xf32>
    %cst_1 = arith.constant 0.000000e+00 : f32
    %4 = vector.broadcast %cst_1 : f32 to vector<8x128xf32>
    %c0_i32_2 = arith.constant 0 : i32
    %c288_i32 = arith.constant 288 : i32
    %5 = arith.muli %c0_i32_2, %c288_i32 : i32
    %6 = tpu.assume_multiple %5, 288 : i32
    %7 = arith.index_cast %6 : i32 to index
    %c0 = arith.constant 0 : index
    %8 = vector.load %arg2[%7, %c0] : memref<576x128xf32, #tpu.memory_space<vmem>>, vector<288x128xf32>
    %9 = arith.index_cast %6 : i32 to index
    %c0_3 = arith.constant 0 : index
    %10 = vector.load %arg3[%9, %c0_3] : memref<576x128xf32, #tpu.memory_space<vmem>>, vector<288x128xf32>
    %cst_4 = arith.constant 1.000000e+00 : f32
    %11 = vector.broadcast %cst_4 : f32 to vector<288x128xf32>
    %12 = arith.cmpf oeq, %10, %11 : vector<288x128xf32>
    %cst_5 = arith.constant 1.000000e+00 : f32
    %13 = vector.broadcast %cst_5 : f32 to vector<288x128xf32>
    %14 = arith.subf %13, %8 : vector<288x128xf32>
    %15 = arith.select %12, %8, %14 : vector<288x128xi1>, vector<288x128xf32>
    %16 = math.log %15 : vector<288x128xf32>
    %17 = arith.mulf %14, %14 : vector<288x128xf32>
    %18 = arith.mulf %8, %8 : vector<288x128xf32>
    %cst_6 = arith.constant 1.000000e+00 : f32
    %19 = vector.broadcast %cst_6 : f32 to vector<288x128xf32>
    %20 = arith.subf %19, %10 : vector<288x128xf32>
    %21 = arith.mulf %20, %20 : vector<288x128xf32>
    %22 = arith.mulf %21, %21 : vector<288x128xf32>
    %23 = arith.mulf %18, %22 : vector<288x128xf32>
    %24 = arith.select %12, %17, %23 : vector<288x128xi1>, vector<288x128xf32>
    %cst_7 = arith.constant 1.000000e+00 : f32
    %25 = vector.broadcast %cst_7 : f32 to vector<288x128xf32>
    %26 = arith.cmpf ole, %10, %25 : vector<288x128xf32>
    %27 = arith.extui %26 : vector<288x128xi1> to vector<288x128xi32>
    %28 = arith.sitofp %27 : vector<288x128xi32> to vector<288x128xf32>
    %29 = arith.extui %12 : vector<288x128xi1> to vector<288x128xi32>
    %30 = arith.sitofp %29 : vector<288x128xi32> to vector<288x128xf32>
    %31 = arith.mulf %16, %24 : vector<288x128xf32>
    %32 = arith.mulf %31, %28 : vector<288x128xf32>
    %33 = vector.shape_cast %32 : vector<288x128xf32> to vector<36x8x128xf32>
    %cst_8 = arith.constant dense<0.000000e+00> : vector<8x128xf32>
    %34 = vector.multi_reduction <add>, %33, %cst_8 [0] : vector<36x8x128xf32> to vector<8x128xf32>
    %35 = arith.addf %3, %34 : vector<8x128xf32>
    %36 = vector.shape_cast %30 : vector<288x128xf32> to vector<36x8x128xf32>
    %cst_9 = arith.constant dense<0.000000e+00> : vector<8x128xf32>
    %37 = vector.multi_reduction <add>, %36, %cst_9 [0] : vector<36x8x128xf32> to vector<8x128xf32>
    %38 = arith.addf %4, %37 : vector<8x128xf32>
    %c1_i32 = arith.constant 1 : i32
    %c288_i32_10 = arith.constant 288 : i32
    %39 = arith.muli %c1_i32, %c288_i32_10 : i32
    %40 = tpu.assume_multiple %39, 288 : i32
    %41 = arith.index_cast %40 : i32 to index
    %c0_11 = arith.constant 0 : index
    %42 = vector.load %arg2[%41, %c0_11] : memref<576x128xf32, #tpu.memory_space<vmem>>, vector<288x128xf32>
    %43 = arith.index_cast %40 : i32 to index
    %c0_12 = arith.constant 0 : index
    %44 = vector.load %arg3[%43, %c0_12] : memref<576x128xf32, #tpu.memory_space<vmem>>, vector<288x128xf32>
    %cst_13 = arith.constant 1.000000e+00 : f32
    %45 = vector.broadcast %cst_13 : f32 to vector<288x128xf32>
    %46 = arith.cmpf oeq, %44, %45 : vector<288x128xf32>
    %cst_14 = arith.constant 1.000000e+00 : f32
    %47 = vector.broadcast %cst_14 : f32 to vector<288x128xf32>
    %48 = arith.subf %47, %42 : vector<288x128xf32>
    %49 = arith.select %46, %42, %48 : vector<288x128xi1>, vector<288x128xf32>
    %50 = math.log %49 : vector<288x128xf32>
    %51 = arith.mulf %48, %48 : vector<288x128xf32>
    %52 = arith.mulf %42, %42 : vector<288x128xf32>
    %cst_15 = arith.constant 1.000000e+00 : f32
    %53 = vector.broadcast %cst_15 : f32 to vector<288x128xf32>
    %54 = arith.subf %53, %44 : vector<288x128xf32>
    %55 = arith.mulf %54, %54 : vector<288x128xf32>
    %56 = arith.mulf %55, %55 : vector<288x128xf32>
    %57 = arith.mulf %52, %56 : vector<288x128xf32>
    %58 = arith.select %46, %51, %57 : vector<288x128xi1>, vector<288x128xf32>
    %cst_16 = arith.constant 1.000000e+00 : f32
    %59 = vector.broadcast %cst_16 : f32 to vector<288x128xf32>
    %60 = arith.cmpf ole, %44, %59 : vector<288x128xf32>
    %61 = arith.extui %60 : vector<288x128xi1> to vector<288x128xi32>
    %62 = arith.sitofp %61 : vector<288x128xi32> to vector<288x128xf32>
    %63 = arith.extui %46 : vector<288x128xi1> to vector<288x128xi32>
    %64 = arith.sitofp %63 : vector<288x128xi32> to vector<288x128xf32>
    %65 = arith.mulf %50, %58 : vector<288x128xf32>
    %66 = arith.mulf %65, %62 : vector<288x128xf32>
    %67 = vector.shape_cast %66 : vector<288x128xf32> to vector<36x8x128xf32>
    %cst_17 = arith.constant dense<0.000000e+00> : vector<8x128xf32>
    %68 = vector.multi_reduction <add>, %67, %cst_17 [0] : vector<36x8x128xf32> to vector<8x128xf32>
    %69 = arith.addf %35, %68 : vector<8x128xf32>
    %70 = vector.shape_cast %64 : vector<288x128xf32> to vector<36x8x128xf32>
    %cst_18 = arith.constant dense<0.000000e+00> : vector<8x128xf32>
    %71 = vector.multi_reduction <add>, %70, %cst_18 [0] : vector<36x8x128xf32> to vector<8x128xf32>
    %72 = arith.addf %38, %71 : vector<8x128xf32>
    %c2_i32 = arith.constant 2 : i32
    %c0_19 = arith.constant 0 : index
    %c0_20 = arith.constant 0 : index
    %73 = vector.load %arg4[%c0_19, %c0_20] : memref<16x128xf32, #tpu.memory_space<vmem>>, vector<8x128xf32>
    %74 = arith.addf %73, %69 : vector<8x128xf32>
    %c0_21 = arith.constant 0 : index
    %c0_22 = arith.constant 0 : index
    %75 = vector.load %arg4[%c0_21, %c0_22] : memref<16x128xf32, #tpu.memory_space<vmem>>, vector<8x128xf32>
    tpu.vector_store %arg4[%c0_21, %c0_22], %74 {strides = array<i32>} : memref<16x128xf32, #tpu.memory_space<vmem>>, vector<8x128xf32>,
    %c8 = arith.constant 8 : index
    %c0_23 = arith.constant 0 : index
    %76 = vector.load %arg4[%c8, %c0_23] : memref<16x128xf32, #tpu.memory_space<vmem>>, vector<8x128xf32>
    %77 = arith.addf %76, %72 : vector<8x128xf32>
    %c8_24 = arith.constant 8 : index
    %c0_25 = arith.constant 0 : index
    %78 = vector.load %arg4[%c8_24, %c0_25] : memref<16x128xf32, #tpu.memory_space<vmem>>, vector<8x128xf32>
    tpu.vector_store %arg4[%c8_24, %c0_25], %77 {strides = array<i32>} : memref<16x128xf32, #tpu.memory_space<vmem>>, vector<8x128xf32>,
    return
  }
  func.func @transform_0(%arg0: i32, %arg1: i32) -> (i32, i32) {
    %c1_i32 = arith.constant 1 : i32
    %0 = arith.muli %arg0, %c1_i32 : i32
    %1 = arith.addi %0, %arg1 : i32
    %c0_i32 = arith.constant 0 : i32
    %c0_i32_0 = arith.constant 0 : i32
    return %1, %c0_i32 : i32, i32
  }
  func.func @transform_1(%arg0: i32, %arg1: i32) -> (i32, i32) {
    %c1_i32 = arith.constant 1 : i32
    %0 = arith.muli %arg0, %c1_i32 : i32
    %1 = arith.addi %0, %arg1 : i32
    %c0_i32 = arith.constant 0 : i32
    %c0_i32_0 = arith.constant 0 : i32
    return %1, %c0_i32 : i32, i32
  }
  func.func @transform_2(%arg0: i32, %arg1: i32) -> (i32, i32) {
    %c0_i32 = arith.constant 0 : i32
    %c0_i32_0 = arith.constant 0 : i32
    return %arg0, %c0_i32 : i32, i32
  }
}

</mosaic_0001>

<llo_original>
// kernel: tpu_custom_call.1
$region0: #{tpu_custom_call.1}
  #allocation0 [shape = 'u32[]', space=smem, size = 0x4, offset = 0x4, fixed_abs, tag = 'smem constant byte address 0x4 - core index']
  #allocation1 [shape = 'u32[144,128]{1,0:T(1,128)}', space=vmem, size = 0x12000, scoped, tag = 'internal scratch']
  %s0 = inlined_call_operand.hbm [shape: f32[1152,128], index: 0, kind: input, shape index: {}]
  %s1 = inlined_call_operand.hbm [shape: f32[1152,128], index: 1, kind: input, shape index: {}]
  %s2 = inlined_call_operand.hbm [shape: f32[32,128], index: 2, kind: output, shape index: {}]
  %s3 = sld [smem:[#allocation0]]
  $region53: #{tpu_custom_call.1} parent=0
    _
  %s5 = ssub.s32 1, %s3
  %s6 = scalar_select 0, %s5, %s3
  $region1: #{tpu_custom_call.1} parent=0
    #allocation2 [shape = 'u8[589824]{0}', space=vmem, size = 0x90000, scoped, tag = 'input window, operand 0']
    #allocation3 [shape = 's32[2]{0}', space=sflag, size = 0x8, scoped, tag = 'scoped memory for tpu_custom_call.1']
    #allocation4 [shape = 's32[2]{0}', space=sflag, size = 0x8, scoped, tag = 'scoped memory for tpu_custom_call.1']
    #allocation5 [shape = 'u8[589824]{0}', space=vmem, size = 0x90000, scoped, tag = 'input window, operand 1']
    #allocation6 [shape = 's32[2]{0}', space=sflag, size = 0x8, scoped, tag = 'scoped memory for tpu_custom_call.1']
    #allocation7 [shape = 'u8[16384]{0}', space=vmem, size = 0x4000, scoped, tag = 'output window, operand 0']
    %7 = vsyncpa [#allocation3], 0
    %s8 = scalar_lea.sflag [#allocation3], 1
    %9 = vsyncpa %s8, 0
    %10 = vsyncpa [#allocation6], 0
    %s11 = scalar_lea.sflag [#allocation6], 1
    %12 = vsyncpa %s11, 0
    %13 = vsyncpa [#allocation4], 0
    %s14 = scalar_lea.sflag [#allocation4], 1
    %15 = vsyncpa %s14, 0
    loop: start=0, step=1, limit=4
    $region2: #{tpu_custom_call.1} parent=1 // loop_pre_header
      _
    $region3: #{tpu_custom_call.1} parent=1 // loop_header
      %s17 = sphi 0, %s21
      %p18 = scmp.ge.s32.totalorder %s17, 4
      %s24 = sphi 0, %s36
      %s25 = sphi 0, %s32
      %s26 = sphi 0, %s24
      %s27 = sphi 0, %s25
      %s28 = sphi 0, %s26
      %s29 = sphi 0, %s27
      %s41 = sphi 0, %s43
      %s44 = sphi 0, %s41
      %s45 = sphi 0, %s44
      %s61 = sphi 0, %s45
      %s69 = sphi 0, %s71
      %s72 = sphi 0, %s69
      %s73 = sphi 0, %s72
      %s89 = sphi 0, %s73
      %s95 = sphi 0, %s97
      %s98 = sphi 0, %s95
      %s99 = sphi 0, %s98
      %s115 = sphi 0, %s99
    $region4: #{tpu_custom_call.1} parent=1 // loop_header_branch
      %20 = sbr.rel (%p18) target = $region8
    $region5: #{tpu_custom_call.1} parent=1 // loop_body
      %s22 = ssub.s32 %s17, 1
      %s23 = ssub.s32 %s17, 2
      %s30 = sadd.s32 1, %s25
      %p31 = scmp.ge.s32.totalorder %s30, 1
      %s32 = scalar_select %p31, 0, %s30
      %s33 = sadd.s32 1, %s24
      %s34 = scalar_select %p31, %s33, %s24
      %p35 = scmp.ge.s32.totalorder %s34, 2
      %s36 = scalar_select %p35, 0, %s34
      %s37 = sadd.s32 %s24, %s25
      %s38 = sadd.s32 %s36, %s32
      %s39 = ssub.s32 %s37, %s38
      %p40 = scmp.eq.s32.totalorder %s39, 0
      %s42 = sadd.s32 %s41, 1
      %s43 = scalar_select %p40, %s41, %s42
      %p46 = pneg %p40
      %p47 = scmp.eq.s32.totalorder %s17, 1
      %p48 = por %p46, %p47
      %p49 = scmp.ne.s32.totalorder %s41, %s44
      %p50 = scmp.eq.s32.totalorder %s17, 0
      %p51 = por %p49, %p50
      %p52 = scmp.ne.s32.totalorder %s41, %s44
      %p53 = scmp.eq.s32.totalorder %s22, 1
      %p54 = por %p52, %p53
      %p55 = scmp.ne.s32.totalorder %s44, %s45
      %p56 = scmp.eq.s32.totalorder %s22, 0
      %p57 = por %p55, %p56
      %p58 = scmp.ne.s32.totalorder %s44, %s45
      %p59 = scmp.eq.s32.totalorder %s23, 1
      %p60 = por %p58, %p59
      %p62 = scmp.ne.s32.totalorder %s45, %s61
      %p63 = scmp.eq.s32.totalorder %s23, 0
      %p64 = por %p62, %p63
      %s65 = sadd.s32 %s24, %s25
      %s66 = sadd.s32 %s36, %s32
      %s67 = ssub.s32 %s65, %s66
      %p68 = scmp.eq.s32.totalorder %s67, 0
      %s70 = sadd.s32 %s69, 1
      %s71 = scalar_select %p68, %s69, %s70
      %p74 = pneg %p68
      %p75 = scmp.eq.s32.totalorder %s17, 1
      %p76 = por %p74, %p75
      %p77 = scmp.ne.s32.totalorder %s69, %s72
      %p78 = scmp.eq.s32.totalorder %s17, 0
      %p79 = por %p77, %p78
      %p80 = scmp.ne.s32.totalorder %s69, %s72
      %p81 = scmp.eq.s32.totalorder %s22, 1
      %p82 = por %p80, %p81
      %p83 = scmp.ne.s32.totalorder %s72, %s73
      %p84 = scmp.eq.s32.totalorder %s22, 0
      %p85 = por %p83, %p84
      %p86 = scmp.ne.s32.totalorder %s72, %s73
      %p87 = scmp.eq.s32.totalorder %s23, 1
      %p88 = por %p86, %p87
      %p90 = scmp.ne.s32.totalorder %s73, %s89
      %p91 = scmp.eq.s32.totalorder %s23, 0
      %p92 = por %p90, %p91
      %s93 = ssub.s32 %s24, %s36
      %p94 = scmp.eq.s32.totalorder %s93, 0
      %s96 = sadd.s32 %s95, 1
      %s97 = scalar_select %p94, %s95, %s96
      %p100 = pneg %p94
      %p101 = scmp.eq.s32.totalorder %s17, 1
      %p102 = por %p100, %p101
      %p103 = scmp.ne.s32.totalorder %s95, %s98
      %p104 = scmp.eq.s32.totalorder %s17, 0
      %p105 = por %p103, %p104
      %p106 = scmp.ne.s32.totalorder %s95, %s98
      %p107 = scmp.eq.s32.totalorder %s22, 1
      %p108 = por %p106, %p107
      %p109 = scmp.ne.s32.totalorder %s98, %s99
      %p110 = scmp.eq.s32.totalorder %s22, 0
      %p111 = por %p109, %p110
      %p112 = scmp.ne.s32.totalorder %s98, %s99
      %p113 = scmp.eq.s32.totalorder %s23, 1
      %p114 = por %p112, %p113
      %p116 = scmp.ne.s32.totalorder %s99, %s115
      %p117 = scmp.eq.s32.totalorder %s23, 0
      %p118 = por %p116, %p117
      %p119 = scmp.le.s32.totalorder 1, %s17
      %p120 = scmp.lt.s32.totalorder %s17, 3
      %p121 = pnand %p119, %p120
      %p122 = pneg %p121
      // Predicated region
      $region9: #{tpu_custom_call.1} parent=5 // pred_check
        _
      $region10: #{tpu_custom_call.1} parent=5 // pred_check_branch
        %124 = sbr.rel (%p121) target = $region12
      $region11: #{tpu_custom_call.1} parent=5 // pred_region
        %s125 = ssub.s32 %s17, 1
      $region12: #{tpu_custom_call.1} parent=5 // pred_fallthru
        _
      %p126 = scmp.lt.s32.totalorder %s17, 2
      // Predicated region
      $region13: #{tpu_custom_call.1} parent=5 // pred_check
        %p127 = pneg %p126
      $region14: #{tpu_custom_call.1} parent=5 // pred_check_branch
        %129 = sbr.rel (%p127) target = $region16
      $region15: #{tpu_custom_call.1} parent=5 // pred_region
        // Predicated region
        $region17: #{tpu_custom_call.1} parent=15 // pred_check
          %p130 = pneg %p51
        $region18: #{tpu_custom_call.1} parent=15 // pred_check_branch
          %132 = sbr.rel (%p130) target = $region20
        $region19: #{tpu_custom_call.1} parent=15 // pred_region
          %s133 = sand.u32 %s41, 1
          %s134 = scalar_lea.sflag [#allocation3], %s133
          %s135 = sand.u32 %s41, 1
          %s136 = smul.addr %s135, 576
          %s137 = scalar_lea.vmem [#allocation2], %s136
          %s138 = sadd.s32 %s24, %s25
          %s139 = smul.u32 72, %s138
          %s141 = ssub.s32 9216, 9216
          %142 = vsyncadd %s134, %s141
          %s143 = smul.addr %s139, 128
          %s144 = scalar_lea.hbm %s0, %s143
          %s145 = sshll.u32 %s137, 4
          %s146 = int_to_ptr.vmem [resolvable:$true] %s145
          %151 = dma.hbm_to_vmem [thread:$0]  %s144, 9216, %s146, %s134, 128, 128, 8
        $region20: #{tpu_custom_call.1} parent=15 // pred_fallthru
          _
        // Predicated region
        $region21: #{tpu_custom_call.1} parent=15 // pred_check
          %p152 = pneg %p79
        $region22: #{tpu_custom_call.1} parent=15 // pred_check_branch
          %154 = sbr.rel (%p152) target = $region24
        $region23: #{tpu_custom_call.1} parent=15 // pred_region
          %s155 = sand.u32 %s69, 1
          %s156 = scalar_lea.sflag [#allocation6], %s155
          %s157 = sand.u32 %s69, 1
          %s158 = smul.addr %s157, 576
          %s159 = scalar_lea.vmem [#allocation5], %s158
          %s160 = sadd.s32 %s24, %s25
          %s161 = smul.u32 72, %s160
          %s163 = ssub.s32 9216, 9216
          %164 = vsyncadd %s156, %s163
          %s165 = smul.addr %s161, 128
          %s166 = scalar_lea.hbm %s1, %s165
          %s167 = sshll.u32 %s159, 4
          %s168 = int_to_ptr.vmem [resolvable:$true] %s167
          %173 = dma.hbm_to_vmem [thread:$0]  %s166, 9216, %s168, %s156, 128, 128, 8
        $region24: #{tpu_custom_call.1} parent=15 // pred_fallthru
          _
      $region16: #{tpu_custom_call.1} parent=5 // pred_fallthru
        _
      %p174 = scmp.le.s32.totalorder 1, %s17
      %p175 = scmp.lt.s32.totalorder %s17, 3
      %p176 = pnand %p174, %p175
      %p177 = pneg %p176
      // Predicated region
      $region25: #{tpu_custom_call.1} parent=5 // pred_check
        _
      $region26: #{tpu_custom_call.1} parent=5 // pred_check_branch
        %179 = sbr.rel (%p176) target = $region28
      $region27: #{tpu_custom_call.1} parent=5 // pred_region
        %s180 = ssub.s32 %s17, 1
        %s181 = sand.u32 %s44, 1
        %s182 = scalar_lea.sflag [#allocation3], %s181
        %s183 = sand.u32 %s44, 1
        %s184 = smul.addr %s183, 576
        %s185 = scalar_lea.vmem [#allocation2], %s184
        // Predicated region
        $region29: #{tpu_custom_call.1} parent=27 // pred_check
          %p186 = pneg %p57
        $region30: #{tpu_custom_call.1} parent=27 // pred_check_branch
          %188 = sbr.rel (%p186) target = $region32
        $region31: #{tpu_custom_call.1} parent=27 // pred_region
          %189 = dma.done %s182, 9216
        $region32: #{tpu_custom_call.1} parent=27 // pred_fallthru
          _
        %s190 = sand.u32 %s72, 1
        %s191 = scalar_lea.sflag [#allocation6], %s190
        %s192 = sand.u32 %s72, 1
        %s193 = smul.addr %s192, 576
        %s194 = scalar_lea.vmem [#allocation5], %s193
        // Predicated region
        $region33: #{tpu_custom_call.1} parent=27 // pred_check
          %p195 = pneg %p85
        $region34: #{tpu_custom_call.1} parent=27 // pred_check_branch
          %197 = sbr.rel (%p195) target = $region36
        $region35: #{tpu_custom_call.1} parent=27 // pred_region
          %198 = dma.done %s191, 9216
        $region36: #{tpu_custom_call.1} parent=27 // pred_fallthru
          _
        %s199 = sand.u32 %s44, 1
        %s200 = scalar_lea.sflag [#allocation3], %s199
        %s201 = sand.u32 %s44, 1
        %s202 = smul.addr %s201, 576
        %s203 = scalar_lea.vmem [#allocation2], %s202
        %p204 = pneg %p57
        %p205 = pneg %p54
        %s206 = sand.u32 %s72, 1
        %s207 = scalar_lea.sflag [#allocation6], %s206
        %s208 = sand.u32 %s72, 1
        %s209 = smul.addr %s208, 576
        %s210 = scalar_lea.vmem [#allocation5], %s209
        %p211 = pneg %p85
        %p212 = pneg %p82
        %p213 = pneg %p111
        %p214 = pneg %p108
        %s215 = sand.u32 %s98, 1
        %s216 = scalar_lea.sflag [#allocation4], %s215
        %s217 = sand.u32 %s98, 1
        %s218 = smul.addr %s217, 16
        %s219 = scalar_lea.vmem [#allocation7], %s218
        %s220 = sadd.s32 %s26, %s27
        %s221 = smul.u32 72, %s220
        %s222 = sadd.s32 %s26, %s27
        %s223 = smul.u32 72, %s222
        %s224 = smul.u32 2, %s26
        %p225 = scmp.eq.s32.totalorder %s27, 0
        // Predicated region
        $region37: #{tpu_custom_call.1} parent=27 // pred_check
          %p226 = pneg %p225
        $region38: #{tpu_custom_call.1} parent=27 // pred_check_branch
          %228 = sbr.rel (%p226) target = $region40
        $region39: #{tpu_custom_call.1} parent=27 // pred_region
          %229 = vst [vmem:[%s219] sm:$0xff] 0.0
          %230 = vst [vmem:[%s219 + $0x8] sm:$0xff] 0.0
        $region40: #{tpu_custom_call.1} parent=27 // pred_fallthru
          _
        %v231 = vld [vmem:[%s185] sm:$0xff]
        %v232 = vld [vmem:[%s185 + $0x8] sm:$0xff]
        %v233 = vld [vmem:[%s185 + $0x10] sm:$0xff]
        %v234 = vld [vmem:[%s185 + $0x18] sm:$0xff]
        %v235 = vld [vmem:[%s185 + $0x20] sm:$0xff]
        %v236 = vld [vmem:[%s185 + $0x28] sm:$0xff]
        %v237 = vld [vmem:[%s185 + $0x30] sm:$0xff]
        %v238 = vld [vmem:[%s185 + $0x38] sm:$0xff]
        %v239 = vld [vmem:[%s185 + $0x40] sm:$0xff]
        %v240 = vld [vmem:[%s185 + $0x48] sm:$0xff]
        %v241 = vld [vmem:[%s185 + $0x50] sm:$0xff]
        %v242 = vld [vmem:[%s185 + $0x58] sm:$0xff]
        %v243 = vld [vmem:[%s185 + $0x60] sm:$0xff]
        %v244 = vld [vmem:[%s185 + $0x68] sm:$0xff]
        %v245 = vld [vmem:[%s185 + $0x70] sm:$0xff]
        %v246 = vld [vmem:[%s185 + $0x78] sm:$0xff]
        %v247 = vld [vmem:[%s185 + $0x80] sm:$0xff]
        %v248 = vld [vmem:[%s185 + $0x88] sm:$0xff]
        %v249 = vld [vmem:[%s185 + $0x90] sm:$0xff]
        %v250 = vld [vmem:[%s185 + $0x98] sm:$0xff]
        %v251 = vld [vmem:[%s185 + $0xa0] sm:$0xff]
        %v252 = vld [vmem:[%s185 + $0xa8] sm:$0xff]
        %v253 = vld [vmem:[%s185 + $0xb0] sm:$0xff]
        %v254 = vld [vmem:[%s185 + $0xb8] sm:$0xff]
        %v255 = vld [vmem:[%s185 + $0xc0] sm:$0xff]
        %v256 = vld [vmem:[%s185 + $0xc8] sm:$0xff]
        %v257 = vld [vmem:[%s185 + $0xd0] sm:$0xff]
        %v258 = vld [vmem:[%s185 + $0xd8] sm:$0xff]
        %v259 = vld [vmem:[%s185 + $0xe0] sm:$0xff]
        %v260 = vld [vmem:[%s185 + $0xe8] sm:$0xff]
        %v261 = vld [vmem:[%s185 + $0xf0] sm:$0xff]
        %v262 = vld [vmem:[%s185 + $0xf8] sm:$0xff]
        %v263 = vld [vmem:[%s185 + $0x100] sm:$0xff]
        %v264 = vld [vmem:[%s185 + $0x108] sm:$0xff]
        %v265 = vld [vmem:[%s185 + $0x110] sm:$0xff]
        %v266 = vld [vmem:[%s185 + $0x118] sm:$0xff]
        %v267 = vld [vmem:[%s194] sm:$0xff]
        %v268 = vld [vmem:[%s194 + $0x8] sm:$0xff]
        %v269 = vld [vmem:[%s194 + $0x10] sm:$0xff]
        %v270 = vld [vmem:[%s194 + $0x18] sm:$0xff]
        %v271 = vld [vmem:[%s194 + $0x20] sm:$0xff]
        %v272 = vld [vmem:[%s194 + $0x28] sm:$0xff]
        %v273 = vld [vmem:[%s194 + $0x30] sm:$0xff]
        %v274 = vld [vmem:[%s194 + $0x38] sm:$0xff]
        %v275 = vld [vmem:[%s194 + $0x40] sm:$0xff]
        %v276 = vld [vmem:[%s194 + $0x48] sm:$0xff]
        %v277 = vld [vmem:[%s194 + $0x50] sm:$0xff]
        %v278 = vld [vmem:[%s194 + $0x58] sm:$0xff]
        %v279 = vld [vmem:[%s194 + $0x60] sm:$0xff]
        %v280 = vld [vmem:[%s194 + $0x68] sm:$0xff]
        %v281 = vld [vmem:[%s194 + $0x70] sm:$0xff]
        %v282 = vld [vmem:[%s194 + $0x78] sm:$0xff]
        %v283 = vld [vmem:[%s194 + $0x80] sm:$0xff]
        %v284 = vld [vmem:[%s194 + $0x88] sm:$0xff]
        %v285 = vld [vmem:[%s194 + $0x90] sm:$0xff]
        %v286 = vld [vmem:[%s194 + $0x98] sm:$0xff]
        %v287 = vld [vmem:[%s194 + $0xa0] sm:$0xff]
        %v288 = vld [vmem:[%s194 + $0xa8] sm:$0xff]
        %v289 = vld [vmem:[%s194 + $0xb0] sm:$0xff]
        %v290 = vld [vmem:[%s194 + $0xb8] sm:$0xff]
        %v291 = vld [vmem:[%s194 + $0xc0] sm:$0xff]
        %v292 = vld [vmem:[%s194 + $0xc8] sm:$0xff]
        %v293 = vld [vmem:[%s194 + $0xd0] sm:$0xff]
        %v294 = vld [vmem:[%s194 + $0xd8] sm:$0xff]
        %v295 = vld [vmem:[%s194 + $0xe0] sm:$0xff]
        %v296 = vld [vmem:[%s194 + $0xe8] sm:$0xff]
        %v297 = vld [vmem:[%s194 + $0xf0] sm:$0xff]
        %v298 = vld [vmem:[%s194 + $0xf8] sm:$0xff]
        %v299 = vld [vmem:[%s194 + $0x100] sm:$0xff]
        %v300 = vld [vmem:[%s194 + $0x108] sm:$0xff]
        %v301 = vld [vmem:[%s194 + $0x110] sm:$0xff]
        %v302 = vld [vmem:[%s194 + $0x118] sm:$0xff]
        %vm303 = vcmp.eq.f32.partialorder %v267, 1.0
        %vm304 = vcmp.eq.f32.partialorder %v268, 1.0
        %vm305 = vcmp.eq.f32.partialorder %v269, 1.0
        %vm306 = vcmp.eq.f32.partialorder %v270, 1.0
        %vm307 = vcmp.eq.f32.partialorder %v271, 1.0
        %vm308 = vcmp.eq.f32.partialorder %v272, 1.0
        %vm309 = vcmp.eq.f32.partialorder %v273, 1.0
        %vm310 = vcmp.eq.f32.partialorder %v274, 1.0
        %vm311 = vcmp.eq.f32.partialorder %v275, 1.0
        %vm312 = vcmp.eq.f32.partialorder %v276, 1.0
        %vm313 = vcmp.eq.f32.partialorder %v277, 1.0
        %vm314 = vcmp.eq.f32.partialorder %v278, 1.0
        %vm315 = vcmp.eq.f32.partialorder %v279, 1.0
        %vm316 = vcmp.eq.f32.partialorder %v280, 1.0
        %vm317 = vcmp.eq.f32.partialorder %v281, 1.0
        %vm318 = vcmp.eq.f32.partialorder %v282, 1.0
        %vm319 = vcmp.eq.f32.partialorder %v283, 1.0
        %vm320 = vcmp.eq.f32.partialorder %v284, 1.0
        %vm321 = vcmp.eq.f32.partialorder %v285, 1.0
        %vm322 = vcmp.eq.f32.partialorder %v286, 1.0
        %vm323 = vcmp.eq.f32.partialorder %v287, 1.0
        %vm324 = vcmp.eq.f32.partialorder %v288, 1.0
        %vm325 = vcmp.eq.f32.partialorder %v289, 1.0
        %vm326 = vcmp.eq.f32.partialorder %v290, 1.0
        %vm327 = vcmp.eq.f32.partialorder %v291, 1.0
        %vm328 = vcmp.eq.f32.partialorder %v292, 1.0
        %vm329 = vcmp.eq.f32.partialorder %v293, 1.0
        %vm330 = vcmp.eq.f32.partialorder %v294, 1.0
        %vm331 = vcmp.eq.f32.partialorder %v295, 1.0
        %vm332 = vcmp.eq.f32.partialorder %v296, 1.0
        %vm333 = vcmp.eq.f32.partialorder %v297, 1.0
        %vm334 = vcmp.eq.f32.partialorder %v298, 1.0
        %vm335 = vcmp.eq.f32.partialorder %v299, 1.0
        %vm336 = vcmp.eq.f32.partialorder %v300, 1.0
        %vm337 = vcmp.eq.f32.partialorder %v301, 1.0
        %vm338 = vcmp.eq.f32.partialorder %v302, 1.0
        %v339 = vsub.f32 1.0, %v231
        %v340 = vsub.f32 1.0, %v232
        %v341 = vsub.f32 1.0, %v233
        %v342 = vsub.f32 1.0, %v234
        %v343 = vsub.f32 1.0, %v235
        %v344 = vsub.f32 1.0, %v236
        %v345 = vsub.f32 1.0, %v237
        %v346 = vsub.f32 1.0, %v238
        %v347 = vsub.f32 1.0, %v239
        %v348 = vsub.f32 1.0, %v240
        %v349 = vsub.f32 1.0, %v241
        %v350 = vsub.f32 1.0, %v242
        %v351 = vsub.f32 1.0, %v243
        %v352 = vsub.f32 1.0, %v244
        %v353 = vsub.f32 1.0, %v245
        %v354 = vsub.f32 1.0, %v246
        %v355 = vsub.f32 1.0, %v247
        %v356 = vsub.f32 1.0, %v248
        %v357 = vsub.f32 1.0, %v249
        %v358 = vsub.f32 1.0, %v250
        %v359 = vsub.f32 1.0, %v251
        %v360 = vsub.f32 1.0, %v252
        %v361 = vsub.f32 1.0, %v253
        %v362 = vsub.f32 1.0, %v254
        %v363 = vsub.f32 1.0, %v255
        %v364 = vsub.f32 1.0, %v256
        %v365 = vsub.f32 1.0, %v257
        %v366 = vsub.f32 1.0, %v258
        %v367 = vsub.f32 1.0, %v259
        %v368 = vsub.f32 1.0, %v260
        %v369 = vsub.f32 1.0, %v261
        %v370 = vsub.f32 1.0, %v262
        %v371 = vsub.f32 1.0, %v263
        %v372 = vsub.f32 1.0, %v264
        %v373 = vsub.f32 1.0, %v265
        %v374 = vsub.f32 1.0, %v266
        %v375 = vsel %vm303, %v231, %v339
        %v376 = vsel %vm304, %v232, %v340
        %v377 = vsel %vm305, %v233, %v341
        %v378 = vsel %vm306, %v234, %v342
        %v379 = vsel %vm307, %v235, %v343
        %v380 = vsel %vm308, %v236, %v344
        %v381 = vsel %vm309, %v237, %v345
        %v382 = vsel %vm310, %v238, %v346
        %v383 = vsel %vm311, %v239, %v347
        %v384 = vsel %vm312, %v240, %v348
        %v385 = vsel %vm313, %v241, %v349
        %v386 = vsel %vm314, %v242, %v350
        %v387 = vsel %vm315, %v243, %v351
        %v388 = vsel %vm316, %v244, %v352
        %v389 = vsel %vm317, %v245, %v353
        %v390 = vsel %vm318, %v246, %v354
        %v391 = vsel %vm319, %v247, %v355
        %v392 = vsel %vm320, %v248, %v356
        %v393 = vsel %vm321, %v249, %v357
        %v394 = vsel %vm322, %v250, %v358
        %v395 = vsel %vm323, %v251, %v359
        %v396 = vsel %vm324, %v252, %v360
        %v397 = vsel %vm325, %v253, %v361
        %v398 = vsel %vm326, %v254, %v362
        %v399 = vsel %vm327, %v255, %v363
        %v400 = vsel %vm328, %v256, %v364
        %v401 = vsel %vm329, %v257, %v365
        %v402 = vsel %vm330, %v258, %v366
        %v403 = vsel %vm331, %v259, %v367
        %v404 = vsel %vm332, %v260, %v368
        %v405 = vsel %vm333, %v261, %v369
        %v406 = vsel %vm334, %v262, %v370
        %v407 = vsel %vm335, %v263, %v371
        %v408 = vsel %vm336, %v264, %v372
        %v409 = vsel %vm337, %v265, %v373
        %v410 = vsel %vm338, %v266, %v374
        %v411 = vlog2.pop %v375
        %v412 = vmul.f32 %v411, 0.6931472
        %v413 = vlog2.pop %v376
        %v414 = vmul.f32 %v413, 0.6931472
        %v415 = vlog2.pop %v377
        %v416 = vmul.f32 %v415, 0.6931472
        %v417 = vlog2.pop %v378
        %v418 = vmul.f32 %v417, 0.6931472
        %v419 = vlog2.pop %v379
        %v420 = vmul.f32 %v419, 0.6931472
        %v421 = vlog2.pop %v380
        %v422 = vmul.f32 %v421, 0.6931472
        %v423 = vlog2.pop %v381
        %v424 = vmul.f32 %v423, 0.6931472
        %v425 = vlog2.pop %v382
        %v426 = vmul.f32 %v425, 0.6931472
        %v427 = vlog2.pop %v383
        %v428 = vmul.f32 %v427, 0.6931472
        %v429 = vlog2.pop %v384
        %v430 = vmul.f32 %v429, 0.6931472
        %v431 = vlog2.pop %v385
        %v432 = vmul.f32 %v431, 0.6931472
        %v433 = vlog2.pop %v386
        %v434 = vmul.f32 %v433, 0.6931472
        %v435 = vlog2.pop %v387
        %v436 = vmul.f32 %v435, 0.6931472
        %v437 = vlog2.pop %v388
        %v438 = vmul.f32 %v437, 0.6931472
        %v439 = vlog2.pop %v389
        %v440 = vmul.f32 %v439, 0.6931472
        %v441 = vlog2.pop %v390
        %v442 = vmul.f32 %v441, 0.6931472
        %v443 = vlog2.pop %v391
        %v444 = vmul.f32 %v443, 0.6931472
        %v445 = vlog2.pop %v392
        %v446 = vmul.f32 %v445, 0.6931472
        %v447 = vlog2.pop %v393
        %v448 = vmul.f32 %v447, 0.6931472
        %v449 = vlog2.pop %v394
        %v450 = vmul.f32 %v449, 0.6931472
        %v451 = vlog2.pop %v395
        %v452 = vmul.f32 %v451, 0.6931472
        %v453 = vlog2.pop %v396
        %v454 = vmul.f32 %v453, 0.6931472
        %v455 = vlog2.pop %v397
        %v456 = vmul.f32 %v455, 0.6931472
        %v457 = vlog2.pop %v398
        %v458 = vmul.f32 %v457, 0.6931472
        %v459 = vlog2.pop %v399
        %v460 = vmul.f32 %v459, 0.6931472
        %v461 = vlog2.pop %v400
        %v462 = vmul.f32 %v461, 0.6931472
        %v463 = vlog2.pop %v401
        %v464 = vmul.f32 %v463, 0.6931472
        %v465 = vlog2.pop %v402
        %v466 = vmul.f32 %v465, 0.6931472
        %v467 = vlog2.pop %v403
        %v468 = vmul.f32 %v467, 0.6931472
        %v469 = vlog2.pop %v404
        %v470 = vmul.f32 %v469, 0.6931472
        %v471 = vlog2.pop %v405
        %v472 = vmul.f32 %v471, 0.6931472
        %v473 = vlog2.pop %v406
        %v474 = vmul.f32 %v473, 0.6931472
        %v475 = vlog2.pop %v407
        %v476 = vmul.f32 %v475, 0.6931472
        %v477 = vlog2.pop %v408
        %v478 = vmul.f32 %v477, 0.6931472
        %v479 = vlog2.pop %v409
        %v480 = vmul.f32 %v479, 0.6931472
        %v481 = vlog2.pop %v410
        %v482 = vmul.f32 %v481, 0.6931472
        %v483 = vmul.f32 %v339, %v339
        %v484 = vmul.f32 %v340, %v340
        %v485 = vmul.f32 %v341, %v341
        %v486 = vmul.f32 %v342, %v342
        %v487 = vmul.f32 %v343, %v343
        %v488 = vmul.f32 %v344, %v344
        %v489 = vmul.f32 %v345, %v345
        %v490 = vmul.f32 %v346, %v346
        %v491 = vmul.f32 %v347, %v347
        %v492 = vmul.f32 %v348, %v348
        %v493 = vmul.f32 %v349, %v349
        %v494 = vmul.f32 %v350, %v350
        %v495 = vmul.f32 %v351, %v351
        %v496 = vmul.f32 %v352, %v352
        %v497 = vmul.f32 %v353, %v353
        %v498 = vmul.f32 %v354, %v354
        %v499 = vmul.f32 %v355, %v355
        %v500 = vmul.f32 %v356, %v356
        %v501 = vmul.f32 %v357, %v357
        %v502 = vmul.f32 %v358, %v358
        %v503 = vmul.f32 %v359, %v359
        %v504 = vmul.f32 %v360, %v360
        %v505 = vmul.f32 %v361, %v361
        %v506 = vmul.f32 %v362, %v362
        %v507 = vmul.f32 %v363, %v363
        %v508 = vmul.f32 %v364, %v364
        %v509 = vmul.f32 %v365, %v365
        %v510 = vmul.f32 %v366, %v366
        %v511 = vmul.f32 %v367, %v367
        %v512 = vmul.f32 %v368, %v368
        %v513 = vmul.f32 %v369, %v369
        %v514 = vmul.f32 %v370, %v370
        %v515 = vmul.f32 %v371, %v371
        %v516 = vmul.f32 %v372, %v372
        %v517 = vmul.f32 %v373, %v373
        %v518 = vmul.f32 %v374, %v374
        %v519 = vmul.f32 %v231, %v231
        %v520 = vmul.f32 %v232, %v232
        %v521 = vmul.f32 %v233, %v233
        %v522 = vmul.f32 %v234, %v234
        %v523 = vmul.f32 %v235, %v235
        %v524 = vmul.f32 %v236, %v236
        %v525 = vmul.f32 %v237, %v237
        %v526 = vmul.f32 %v238, %v238
        %v527 = vmul.f32 %v239, %v239
        %v528 = vmul.f32 %v240, %v240
        %v529 = vmul.f32 %v241, %v241
        %v530 = vmul.f32 %v242, %v242
        %v531 = vmul.f32 %v243, %v243
        %v532 = vmul.f32 %v244, %v244
        %v533 = vmul.f32 %v245, %v245
        %v534 = vmul.f32 %v246, %v246
        %v535 = vmul.f32 %v247, %v247
        %v536 = vmul.f32 %v248, %v248
        %v537 = vmul.f32 %v249, %v249
        %v538 = vmul.f32 %v250, %v250
        %v539 = vmul.f32 %v251, %v251
        %v540 = vmul.f32 %v252, %v252
        %v541 = vmul.f32 %v253, %v253
        %v542 = vmul.f32 %v254, %v254
        %v543 = vmul.f32 %v255, %v255
        %v544 = vmul.f32 %v256, %v256
        %v545 = vmul.f32 %v257, %v257
        %v546 = vmul.f32 %v258, %v258
        %v547 = vmul.f32 %v259, %v259
        %v548 = vmul.f32 %v260, %v260
        %v549 = vmul.f32 %v261, %v261
        %v550 = vmul.f32 %v262, %v262
        %v551 = vmul.f32 %v263, %v263
        %v552 = vmul.f32 %v264, %v264
        %v553 = vmul.f32 %v265, %v265
        %v554 = vmul.f32 %v266, %v266
        %v555 = vsub.f32 1.0, %v267
        %v556 = vsub.f32 1.0, %v268
        %v557 = vsub.f32 1.0, %v269
        %v558 = vsub.f32 1.0, %v270
        %v559 = vsub.f32 1.0, %v271
        %v560 = vsub.f32 1.0, %v272
        %v561 = vsub.f32 1.0, %v273
        %v562 = vsub.f32 1.0, %v274
        %v563 = vsub.f32 1.0, %v275
        %v564 = vsub.f32 1.0, %v276
        %v565 = vsub.f32 1.0, %v277
        %v566 = vsub.f32 1.0, %v278
        %v567 = vsub.f32 1.0, %v279
        %v568 = vsub.f32 1.0, %v280
        %v569 = vsub.f32 1.0, %v281
        %v570 = vsub.f32 1.0, %v282
        %v571 = vsub.f32 1.0, %v283
        %v572 = vsub.f32 1.0, %v284
        %v573 = vsub.f32 1.0, %v285
        %v574 = vsub.f32 1.0, %v286
        %v575 = vsub.f32 1.0, %v287
        %v576 = vsub.f32 1.0, %v288
        %v577 = vsub.f32 1.0, %v289
        %v578 = vsub.f32 1.0, %v290
        %v579 = vsub.f32 1.0, %v291
        %v580 = vsub.f32 1.0, %v292
        %v581 = vsub.f32 1.0, %v293
        %v582 = vsub.f32 1.0, %v294
        %v583 = vsub.f32 1.0, %v295
        %v584 = vsub.f32 1.0, %v296
        %v585 = vsub.f32 1.0, %v297
        %v586 = vsub.f32 1.0, %v298
        %v587 = vsub.f32 1.0, %v299
        %v588 = vsub.f32 1.0, %v300
        %v589 = vsub.f32 1.0, %v301
        %v590 = vsub.f32 1.0, %v302
        %v591 = vmul.f32 %v555, %v555
        %v592 = vmul.f32 %v556, %v556
        %v593 = vmul.f32 %v557, %v557
        %v594 = vmul.f32 %v558, %v558
        %v595 = vmul.f32 %v559, %v559
        %v596 = vmul.f32 %v560, %v560
        %v597 = vmul.f32 %v561, %v561
        %v598 = vmul.f32 %v562, %v562
        %v599 = vmul.f32 %v563, %v563
        %v600 = vmul.f32 %v564, %v564
        %v601 = vmul.f32 %v565, %v565
        %v602 = vmul.f32 %v566, %v566
        %v603 = vmul.f32 %v567, %v567
        %v604 = vmul.f32 %v568, %v568
        %v605 = vmul.f32 %v569, %v569
        %v606 = vmul.f32 %v570, %v570
        %v607 = vmul.f32 %v571, %v571
        %v608 = vmul.f32 %v572, %v572
        %v609 = vmul.f32 %v573, %v573
        %v610 = vmul.f32 %v574, %v574
        %v611 = vmul.f32 %v575, %v575
        %v612 = vmul.f32 %v576, %v576
        %v613 = vmul.f32 %v577, %v577
        %v614 = vmul.f32 %v578, %v578
        %v615 = vmul.f32 %v579, %v579
        %v616 = vmul.f32 %v580, %v580
        %v617 = vmul.f32 %v581, %v581
        %v618 = vmul.f32 %v582, %v582
        %v619 = vmul.f32 %v583, %v583
        %v620 = vmul.f32 %v584, %v584
        %v621 = vmul.f32 %v585, %v585
        %v622 = vmul.f32 %v586, %v586
        %v623 = vmul.f32 %v587, %v587
        %v624 = vmul.f32 %v588, %v588
        %v625 = vmul.f32 %v589, %v589
        %v626 = vmul.f32 %v590, %v590
        %v627 = vmul.f32 %v591, %v591
        %v628 = vmul.f32 %v592, %v592
        %v629 = vmul.f32 %v593, %v593
        %v630 = vmul.f32 %v594, %v594
        %v631 = vmul.f32 %v595, %v595
        %v632 = vmul.f32 %v596, %v596
        %v633 = vmul.f32 %v597, %v597
        %v634 = vmul.f32 %v598, %v598
        %v635 = vmul.f32 %v599, %v599
        %v636 = vmul.f32 %v600, %v600
        %v637 = vmul.f32 %v601, %v601
        %v638 = vmul.f32 %v602, %v602
        %v639 = vmul.f32 %v603, %v603
        %v640 = vmul.f32 %v604, %v604
        %v641 = vmul.f32 %v605, %v605
        %v642 = vmul.f32 %v606, %v606
        %v643 = vmul.f32 %v607, %v607
        %v644 = vmul.f32 %v608, %v608
        %v645 = vmul.f32 %v609, %v609
        %v646 = vmul.f32 %v610, %v610
        %v647 = vmul.f32 %v611, %v611
        %v648 = vmul.f32 %v612, %v612
        %v649 = vmul.f32 %v613, %v613
        %v650 = vmul.f32 %v614, %v614
        %v651 = vmul.f32 %v615, %v615
        %v652 = vmul.f32 %v616, %v616
        %v653 = vmul.f32 %v617, %v617
        %v654 = vmul.f32 %v618, %v618
        %v655 = vmul.f32 %v619, %v619
        %v656 = vmul.f32 %v620, %v620
        %v657 = vmul.f32 %v621, %v621
        %v658 = vmul.f32 %v622, %v622
        %v659 = vmul.f32 %v623, %v623
        %v660 = vmul.f32 %v624, %v624
        %v661 = vmul.f32 %v625, %v625
        %v662 = vmul.f32 %v626, %v626
        %v663 = vmul.f32 %v519, %v627
        %v664 = vmul.f32 %v520, %v628
        %v665 = vmul.f32 %v521, %v629
        %v666 = vmul.f32 %v522, %v630
        %v667 = vmul.f32 %v523, %v631
        %v668 = vmul.f32 %v524, %v632
        %v669 = vmul.f32 %v525, %v633
        %v670 = vmul.f32 %v526, %v634
        %v671 = vmul.f32 %v527, %v635
        %v672 = vmul.f32 %v528, %v636
        %v673 = vmul.f32 %v529, %v637
        %v674 = vmul.f32 %v530, %v638
        %v675 = vmul.f32 %v531, %v639
        %v676 = vmul.f32 %v532, %v640
        %v677 = vmul.f32 %v533, %v641
        %v678 = vmul.f32 %v534, %v642
        %v679 = vmul.f32 %v535, %v643
        %v680 = vmul.f32 %v536, %v644
        %v681 = vmul.f32 %v537, %v645
        %v682 = vmul.f32 %v538, %v646
        %v683 = vmul.f32 %v539, %v647
        %v684 = vmul.f32 %v540, %v648
        %v685 = vmul.f32 %v541, %v649
        %v686 = vmul.f32 %v542, %v650
        %v687 = vmul.f32 %v543, %v651
        %v688 = vmul.f32 %v544, %v652
        %v689 = vmul.f32 %v545, %v653
        %v690 = vmul.f32 %v546, %v654
        %v691 = vmul.f32 %v547, %v655
        %v692 = vmul.f32 %v548, %v656
        %v693 = vmul.f32 %v549, %v657
        %v694 = vmul.f32 %v550, %v658
        %v695 = vmul.f32 %v551, %v659
        %v696 = vmul.f32 %v552, %v660
        %v697 = vmul.f32 %v553, %v661
        %v698 = vmul.f32 %v554, %v662
        %v699 = vsel %vm303, %v483, %v663
        %v700 = vsel %vm304, %v484, %v664
        %v701 = vsel %vm305, %v485, %v665
        %v702 = vsel %vm306, %v486, %v666
        %v703 = vsel %vm307, %v487, %v667
        %v704 = vsel %vm308, %v488, %v668
        %v705 = vsel %vm309, %v489, %v669
        %v706 = vsel %vm310, %v490, %v670
        %v707 = vsel %vm311, %v491, %v671
        %v708 = vsel %vm312, %v492, %v672
        %v709 = vsel %vm313, %v493, %v673
        %v710 = vsel %vm314, %v494, %v674
        %v711 = vsel %vm315, %v495, %v675
        %v712 = vsel %vm316, %v496, %v676
        %v713 = vsel %vm317, %v497, %v677
        %v714 = vsel %vm318, %v498, %v678
        %v715 = vsel %vm319, %v499, %v679
        %v716 = vsel %vm320, %v500, %v680
        %v717 = vsel %vm321, %v501, %v681
        %v718 = vsel %vm322, %v502, %v682
        %v719 = vsel %vm323, %v503, %v683
        %v720 = vsel %vm324, %v504, %v684
        %v721 = vsel %vm325, %v505, %v685
        %v722 = vsel %vm326, %v506, %v686
        %v723 = vsel %vm327, %v507, %v687
        %v724 = vsel %vm328, %v508, %v688
        %v725 = vsel %vm329, %v509, %v689
        %v726 = vsel %vm330, %v510, %v690
        %v727 = vsel %vm331, %v511, %v691
        %v728 = vsel %vm332, %v512, %v692
        %v729 = vsel %vm333, %v513, %v693
        %v730 = vsel %vm334, %v514, %v694
        %v731 = vsel %vm335, %v515, %v695
        %v732 = vsel %vm336, %v516, %v696
        %v733 = vsel %vm337, %v517, %v697
        %v734 = vsel %vm338, %v518, %v698
        %vm735 = vcmp.le.f32.partialorder %v267, 1.0
        %vm736 = vcmp.le.f32.partialorder %v268, 1.0
        %vm737 = vcmp.le.f32.partialorder %v269, 1.0
        %vm738 = vcmp.le.f32.partialorder %v270, 1.0
        %vm739 = vcmp.le.f32.partialorder %v271, 1.0
        %vm740 = vcmp.le.f32.partialorder %v272, 1.0
        %vm741 = vcmp.le.f32.partialorder %v273, 1.0
        %vm742 = vcmp.le.f32.partialorder %v274, 1.0
        %vm743 = vcmp.le.f32.partialorder %v275, 1.0
        %vm744 = vcmp.le.f32.partialorder %v276, 1.0
        %vm745 = vcmp.le.f32.partialorder %v277, 1.0
        %vm746 = vcmp.le.f32.partialorder %v278, 1.0
        %vm747 = vcmp.le.f32.partialorder %v279, 1.0
        %vm748 = vcmp.le.f32.partialorder %v280, 1.0
        %vm749 = vcmp.le.f32.partialorder %v281, 1.0
        %vm750 = vcmp.le.f32.partialorder %v282, 1.0
        %vm751 = vcmp.le.f32.partialorder %v283, 1.0
        %vm752 = vcmp.le.f32.partialorder %v284, 1.0
        %vm753 = vcmp.le.f32.partialorder %v285, 1.0
        %vm754 = vcmp.le.f32.partialorder %v286, 1.0
        %vm755 = vcmp.le.f32.partialorder %v287, 1.0
        %vm756 = vcmp.le.f32.partialorder %v288, 1.0
        %vm757 = vcmp.le.f32.partialorder %v289, 1.0
        %vm758 = vcmp.le.f32.partialorder %v290, 1.0
        %vm759 = vcmp.le.f32.partialorder %v291, 1.0
        %vm760 = vcmp.le.f32.partialorder %v292, 1.0
        %vm761 = vcmp.le.f32.partialorder %v293, 1.0
        %vm762 = vcmp.le.f32.partialorder %v294, 1.0
        %vm763 = vcmp.le.f32.partialorder %v295, 1.0
        %vm764 = vcmp.le.f32.partialorder %v296, 1.0
        %vm765 = vcmp.le.f32.partialorder %v297, 1.0
        %vm766 = vcmp.le.f32.partialorder %v298, 1.0
        %vm767 = vcmp.le.f32.partialorder %v299, 1.0
        %vm768 = vcmp.le.f32.partialorder %v300, 1.0
        %vm769 = vcmp.le.f32.partialorder %v301, 1.0
        %vm770 = vcmp.le.f32.partialorder %v302, 1.0
        %v771 = vsel %vm735, 1, 0
        %v772 = vsel %vm736, 1, 0
        %v773 = vsel %vm737, 1, 0
        %v774 = vsel %vm738, 1, 0
        %v775 = vsel %vm739, 1, 0
        %v776 = vsel %vm740, 1, 0
        %v777 = vsel %vm741, 1, 0
        %v778 = vsel %vm742, 1, 0
        %v779 = vsel %vm743, 1, 0
        %v780 = vsel %vm744, 1, 0
        %v781 = vsel %vm745, 1, 0
        %v782 = vsel %vm746, 1, 0
        %v783 = vsel %vm747, 1, 0
        %v784 = vsel %vm748, 1, 0
        %v785 = vsel %vm749, 1, 0
        %v786 = vsel %vm750, 1, 0
        %v787 = vsel %vm751, 1, 0
        %v788 = vsel %vm752, 1, 0
        %v789 = vsel %vm753, 1, 0
        %v790 = vsel %vm754, 1, 0
        %v791 = vsel %vm755, 1, 0
        %v792 = vsel %vm756, 1, 0
        %v793 = vsel %vm757, 1, 0
        %v794 = vsel %vm758, 1, 0
        %v795 = vsel %vm759, 1, 0
        %v796 = vsel %vm760, 1, 0
        %v797 = vsel %vm761, 1, 0
        %v798 = vsel %vm762, 1, 0
        %v799 = vsel %vm763, 1, 0
        %v800 = vsel %vm764, 1, 0
        %v801 = vsel %vm765, 1, 0
        %v802 = vsel %vm766, 1, 0
        %v803 = vsel %vm767, 1, 0
        %v804 = vsel %vm768, 1, 0
        %v805 = vsel %vm769, 1, 0
        %v806 = vsel %vm770, 1, 0
        %v807 = vcvt.s32.f32 %v771
        %v808 = vcvt.s32.f32 %v772
        %v809 = vcvt.s32.f32 %v773
        %v810 = vcvt.s32.f32 %v774
        %v811 = vcvt.s32.f32 %v775
        %v812 = vcvt.s32.f32 %v776
        %v813 = vcvt.s32.f32 %v777
        %v814 = vcvt.s32.f32 %v778
        %v815 = vcvt.s32.f32 %v779
        %v816 = vcvt.s32.f32 %v780
        %v817 = vcvt.s32.f32 %v781
        %v818 = vcvt.s32.f32 %v782
        %v819 = vcvt.s32.f32 %v783
        %v820 = vcvt.s32.f32 %v784
        %v821 = vcvt.s32.f32 %v785
        %v822 = vcvt.s32.f32 %v786
        %v823 = vcvt.s32.f32 %v787
        %v824 = vcvt.s32.f32 %v788
        %v825 = vcvt.s32.f32 %v789
        %v826 = vcvt.s32.f32 %v790
        %v827 = vcvt.s32.f32 %v791
        %v828 = vcvt.s32.f32 %v792
        %v829 = vcvt.s32.f32 %v793
        %v830 = vcvt.s32.f32 %v794
        %v831 = vcvt.s32.f32 %v795
        %v832 = vcvt.s32.f32 %v796
        %v833 = vcvt.s32.f32 %v797
        %v834 = vcvt.s32.f32 %v798
        %v835 = vcvt.s32.f32 %v799
        %v836 = vcvt.s32.f32 %v800
        %v837 = vcvt.s32.f32 %v801
        %v838 = vcvt.s32.f32 %v802
        %v839 = vcvt.s32.f32 %v803
        %v840 = vcvt.s32.f32 %v804
        %v841 = vcvt.s32.f32 %v805
        %v842 = vcvt.s32.f32 %v806
        %v843 = vsel %vm303, 1, 0
        %v844 = vsel %vm304, 1, 0
        %v845 = vsel %vm305, 1, 0
        %v846 = vsel %vm306, 1, 0
        %v847 = vsel %vm307, 1, 0
        %v848 = vsel %vm308, 1, 0
        %v849 = vsel %vm309, 1, 0
        %v850 = vsel %vm310, 1, 0
        %v851 = vsel %vm311, 1, 0
        %v852 = vsel %vm312, 1, 0
        %v853 = vsel %vm313, 1, 0
        %v854 = vsel %vm314, 1, 0
        %v855 = vsel %vm315, 1, 0
        %v856 = vsel %vm316, 1, 0
        %v857 = vsel %vm317, 1, 0
        %v858 = vsel %vm318, 1, 0
        %v859 = vsel %vm319, 1, 0
        %v860 = vsel %vm320, 1, 0
        %v861 = vsel %vm321, 1, 0
        %v862 = vsel %vm322, 1, 0
        %v863 = vsel %vm323, 1, 0
        %v864 = vsel %vm324, 1, 0
        %v865 = vsel %vm325, 1, 0
        %v866 = vsel %vm326, 1, 0
        %v867 = vsel %vm327, 1, 0
        %v868 = vsel %vm328, 1, 0
        %v869 = vsel %vm329, 1, 0
        %v870 = vsel %vm330, 1, 0
        %v871 = vsel %vm331, 1, 0
        %v872 = vsel %vm332, 1, 0
        %v873 = vsel %vm333, 1, 0
        %v874 = vsel %vm334, 1, 0
        %v875 = vsel %vm335, 1, 0
        %v876 = vsel %vm336, 1, 0
        %v877 = vsel %vm337, 1, 0
        %v878 = vsel %vm338, 1, 0
        %v879 = vcvt.s32.f32 %v843
        %v880 = vcvt.s32.f32 %v844
        %v881 = vcvt.s32.f32 %v845
        %v882 = vcvt.s32.f32 %v846
        %v883 = vcvt.s32.f32 %v847
        %v884 = vcvt.s32.f32 %v848
        %v885 = vcvt.s32.f32 %v849
        %v886 = vcvt.s32.f32 %v850
        %v887 = vcvt.s32.f32 %v851
        %v888 = vcvt.s32.f32 %v852
        %v889 = vcvt.s32.f32 %v853
        %v890 = vcvt.s32.f32 %v854
        %v891 = vcvt.s32.f32 %v855
        %v892 = vcvt.s32.f32 %v856
        %v893 = vcvt.s32.f32 %v857
        %v894 = vcvt.s32.f32 %v858
        %v895 = vcvt.s32.f32 %v859
        %v896 = vcvt.s32.f32 %v860
        %v897 = vcvt.s32.f32 %v861
        %v898 = vcvt.s32.f32 %v862
        %v899 = vcvt.s32.f32 %v863
        %v900 = vcvt.s32.f32 %v864
        %v901 = vcvt.s32.f32 %v865
        %v902 = vcvt.s32.f32 %v866
        %v903 = vcvt.s32.f32 %v867
        %v904 = vcvt.s32.f32 %v868
        %v905 = vcvt.s32.f32 %v869
        %v906 = vcvt.s32.f32 %v870
        %v907 = vcvt.s32.f32 %v871
        %v908 = vcvt.s32.f32 %v872
        %v909 = vcvt.s32.f32 %v873
        %v910 = vcvt.s32.f32 %v874
        %v911 = vcvt.s32.f32 %v875
        %v912 = vcvt.s32.f32 %v876
        %v913 = vcvt.s32.f32 %v877
        %v914 = vcvt.s32.f32 %v878
        %v915 = vmul.f32 %v412, %v699
        %v916 = vmul.f32 %v414, %v700
        %v917 = vmul.f32 %v416, %v701
        %v918 = vmul.f32 %v418, %v702
        %v919 = vmul.f32 %v420, %v703
        %v920 = vmul.f32 %v422, %v704
        %v921 = vmul.f32 %v424, %v705
        %v922 = vmul.f32 %v426, %v706
        %v923 = vmul.f32 %v428, %v707
        %v924 = vmul.f32 %v430, %v708
        %v925 = vmul.f32 %v432, %v709
        %v926 = vmul.f32 %v434, %v710
        %v927 = vmul.f32 %v436, %v711
        %v928 = vmul.f32 %v438, %v712
        %v929 = vmul.f32 %v440, %v713
        %v930 = vmul.f32 %v442, %v714
        %v931 = vmul.f32 %v444, %v715
        %v932 = vmul.f32 %v446, %v716
        %v933 = vmul.f32 %v448, %v717
        %v934 = vmul.f32 %v450, %v718
        %v935 = vmul.f32 %v452, %v719
        %v936 = vmul.f32 %v454, %v720
        %v937 = vmul.f32 %v456, %v721
        %v938 = vmul.f32 %v458, %v722
        %v939 = vmul.f32 %v460, %v723
        %v940 = vmul.f32 %v462, %v724
        %v941 = vmul.f32 %v464, %v725
        %v942 = vmul.f32 %v466, %v726
        %v943 = vmul.f32 %v468, %v727
        %v944 = vmul.f32 %v470, %v728
        %v945 = vmul.f32 %v472, %v729
        %v946 = vmul.f32 %v474, %v730
        %v947 = vmul.f32 %v476, %v731
        %v948 = vmul.f32 %v478, %v732
        %v949 = vmul.f32 %v480, %v733
        %v950 = vmul.f32 %v482, %v734
        %v951 = vmul.f32 %v915, %v807
        %v952 = vmul.f32 %v916, %v808
        %v953 = vmul.f32 %v917, %v809
        %v954 = vmul.f32 %v918, %v810
        %v955 = vmul.f32 %v919, %v811
        %v956 = vmul.f32 %v920, %v812
        %v957 = vmul.f32 %v921, %v813
        %v958 = vmul.f32 %v922, %v814
        %v959 = vmul.f32 %v923, %v815
        %v960 = vmul.f32 %v924, %v816
        %v961 = vmul.f32 %v925, %v817
        %v962 = vmul.f32 %v926, %v818
        %v963 = vmul.f32 %v927, %v819
        %v964 = vmul.f32 %v928, %v820
        %v965 = vmul.f32 %v929, %v821
        %v966 = vmul.f32 %v930, %v822
        %v967 = vmul.f32 %v931, %v823
        %v968 = vmul.f32 %v932, %v824
        %v969 = vmul.f32 %v933, %v825
        %v970 = vmul.f32 %v934, %v826
        %v971 = vmul.f32 %v935, %v827
        %v972 = vmul.f32 %v936, %v828
        %v973 = vmul.f32 %v937, %v829
        %v974 = vmul.f32 %v938, %v830
        %v975 = vmul.f32 %v939, %v831
        %v976 = vmul.f32 %v940, %v832
        %v977 = vmul.f32 %v941, %v833
        %v978 = vmul.f32 %v942, %v834
        %v979 = vmul.f32 %v943, %v835
        %v980 = vmul.f32 %v944, %v836
        %v981 = vmul.f32 %v945, %v837
        %v982 = vmul.f32 %v946, %v838
        %v983 = vmul.f32 %v947, %v839
        %v984 = vmul.f32 %v948, %v840
        %v985 = vmul.f32 %v949, %v841
        %v986 = vmul.f32 %v950, %v842
        %v987 = vadd.f32 %v951, %v952
        %v988 = vadd.f32 %v987, %v953
        %v989 = vadd.f32 %v988, %v954
        %v990 = vadd.f32 %v989, %v955
        %v991 = vadd.f32 %v990, %v956
        %v992 = vadd.f32 %v991, %v957
        %v993 = vadd.f32 %v992, %v958
        %v994 = vadd.f32 %v993, %v959
        %v995 = vadd.f32 %v994, %v960
        %v996 = vadd.f32 %v995, %v961
        %v997 = vadd.f32 %v996, %v962
        %v998 = vadd.f32 %v997, %v963
        %v999 = vadd.f32 %v998, %v964
        %v1000 = vadd.f32 %v999, %v965
        %v1001 = vadd.f32 %v1000, %v966
        %v1002 = vadd.f32 %v1001, %v967
        %v1003 = vadd.f32 %v1002, %v968
        %v1004 = vadd.f32 %v1003, %v969
        %v1005 = vadd.f32 %v1004, %v970
        %v1006 = vadd.f32 %v1005, %v971
        %v1007 = vadd.f32 %v1006, %v972
        %v1008 = vadd.f32 %v1007, %v973
        %v1009 = vadd.f32 %v1008, %v974
        %v1010 = vadd.f32 %v1009, %v975
        %v1011 = vadd.f32 %v1010, %v976
        %v1012 = vadd.f32 %v1011, %v977
        %v1013 = vadd.f32 %v1012, %v978
        %v1014 = vadd.f32 %v1013, %v979
        %v1015 = vadd.f32 %v1014, %v980
        %v1016 = vadd.f32 %v1015, %v981
        %v1017 = vadd.f32 %v1016, %v982
        %v1018 = vadd.f32 %v1017, %v983
        %v1019 = vadd.f32 %v1018, %v984
        %v1020 = vadd.f32 %v1019, %v985
        %v1021 = vadd.f32 %v1020, %v986
        %v1022 = vadd.f32 %v1021, 0.0
        %v1023 = vadd.f32 %v879, %v880
        %v1024 = vadd.f32 %v1023, %v881
        %v1025 = vadd.f32 %v1024, %v882
        %v1026 = vadd.f32 %v1025, %v883
        %v1027 = vadd.f32 %v1026, %v884
        %v1028 = vadd.f32 %v1027, %v885
        %v1029 = vadd.f32 %v1028, %v886
        %v1030 = vadd.f32 %v1029, %v887
        %v1031 = vadd.f32 %v1030, %v888
        %v1032 = vadd.f32 %v1031, %v889
        %v1033 = vadd.f32 %v1032, %v890
        %v1034 = vadd.f32 %v1033, %v891
        %v1035 = vadd.f32 %v1034, %v892
        %v1036 = vadd.f32 %v1035, %v893
        %v1037 = vadd.f32 %v1036, %v894
        %v1038 = vadd.f32 %v1037, %v895
        %v1039 = vadd.f32 %v1038, %v896
        %v1040 = vadd.f32 %v1039, %v897
        %v1041 = vadd.f32 %v1040, %v898
        %v1042 = vadd.f32 %v1041, %v899
        %v1043 = vadd.f32 %v1042, %v900
        %v1044 = vadd.f32 %v1043, %v901
        %v1045 = vadd.f32 %v1044, %v902
        %v1046 = vadd.f32 %v1045, %v903
        %v1047 = vadd.f32 %v1046, %v904
        %v1048 = vadd.f32 %v1047, %v905
        %v1049 = vadd.f32 %v1048, %v906
        %v1050 = vadd.f32 %v1049, %v907
        %v1051 = vadd.f32 %v1050, %v908
        %v1052 = vadd.f32 %v1051, %v909
        %v1053 = vadd.f32 %v1052, %v910
        %v1054 = vadd.f32 %v1053, %v911
        %v1055 = vadd.f32 %v1054, %v912
        %v1056 = vadd.f32 %v1055, %v913
        %v1057 = vadd.f32 %v1056, %v914
        %v1058 = vadd.f32 %v1057, 0.0
        %s1059 = scalar_lea.vmem %s185, 288 [#allocation2]
        %v1060 = vld [vmem:[%s1059] sm:$0xff]
        %v1061 = vld [vmem:[%s1059 + $0x8] sm:$0xff]
        %v1062 = vld [vmem:[%s1059 + $0x10] sm:$0xff]
        %v1063 = vld [vmem:[%s1059 + $0x18] sm:$0xff]
        %v1064 = vld [vmem:[%s1059 + $0x20] sm:$0xff]
        %v1065 = vld [vmem:[%s1059 + $0x28] sm:$0xff]
        %v1066 = vld [vmem:[%s1059 + $0x30] sm:$0xff]
        %v1067 = vld [vmem:[%s1059 + $0x38] sm:$0xff]
        %v1068 = vld [vmem:[%s1059 + $0x40] sm:$0xff]
        %v1069 = vld [vmem:[%s1059 + $0x48] sm:$0xff]
        %v1070 = vld [vmem:[%s1059 + $0x50] sm:$0xff]
        %v1071 = vld [vmem:[%s1059 + $0x58] sm:$0xff]
        %v1072 = vld [vmem:[%s1059 + $0x60] sm:$0xff]
        %v1073 = vld [vmem:[%s1059 + $0x68] sm:$0xff]
        %v1074 = vld [vmem:[%s1059 + $0x70] sm:$0xff]
        %v1075 = vld [vmem:[%s1059 + $0x78] sm:$0xff]
        %v1076 = vld [vmem:[%s1059 + $0x80] sm:$0xff]
        %v1077 = vld [vmem:[%s1059 + $0x88] sm:$0xff]
        %v1078 = vld [vmem:[%s1059 + $0x90] sm:$0xff]
        %v1079 = vld [vmem:[%s1059 + $0x98] sm:$0xff]
        %v1080 = vld [vmem:[%s1059 + $0xa0] sm:$0xff]
        %v1081 = vld [vmem:[%s1059 + $0xa8] sm:$0xff]
        %v1082 = vld [vmem:[%s1059 + $0xb0] sm:$0xff]
        %v1083 = vld [vmem:[%s1059 + $0xb8] sm:$0xff]
        %v1084 = vld [vmem:[%s1059 + $0xc0] sm:$0xff]
        %v1085 = vld [vmem:[%s1059 + $0xc8] sm:$0xff]
        %v1086 = vld [vmem:[%s1059 + $0xd0] sm:$0xff]
        %v1087 = vld [vmem:[%s1059 + $0xd8] sm:$0xff]
        %v1088 = vld [vmem:[%s1059 + $0xe0] sm:$0xff]
        %v1089 = vld [vmem:[%s1059 + $0xe8] sm:$0xff]
        %v1090 = vld [vmem:[%s1059 + $0xf0] sm:$0xff]
        %v1091 = vld [vmem:[%s1059 + $0xf8] sm:$0xff]
        %v1092 = vld [vmem:[%s1059 + $0x100] sm:$0xff]
        %v1093 = vld [vmem:[%s1059 + $0x108] sm:$0xff]
        %v1094 = vld [vmem:[%s1059 + $0x110] sm:$0xff]
        %v1095 = vld [vmem:[%s1059 + $0x118] sm:$0xff]
        %s1096 = scalar_lea.vmem %s194, 288 [#allocation5]
        %v1097 = vld [vmem:[%s1096] sm:$0xff]
        %v1098 = vld [vmem:[%s1096 + $0x8] sm:$0xff]
        %v1099 = vld [vmem:[%s1096 + $0x10] sm:$0xff]
        %v1100 = vld [vmem:[%s1096 + $0x18] sm:$0xff]
        %v1101 = vld [vmem:[%s1096 + $0x20] sm:$0xff]
        %v1102 = vld [vmem:[%s1096 + $0x28] sm:$0xff]
        %v1103 = vld [vmem:[%s1096 + $0x30] sm:$0xff]
        %v1104 = vld [vmem:[%s1096 + $0x38] sm:$0xff]
        %v1105 = vld [vmem:[%s1096 + $0x40] sm:$0xff]
        %v1106 = vld [vmem:[%s1096 + $0x48] sm:$0xff]
        %v1107 = vld [vmem:[%s1096 + $0x50] sm:$0xff]
        %v1108 = vld [vmem:[%s1096 + $0x58] sm:$0xff]
        %v1109 = vld [vmem:[%s1096 + $0x60] sm:$0xff]
        %v1110 = vld [vmem:[%s1096 + $0x68] sm:$0xff]
        %v1111 = vld [vmem:[%s1096 + $0x70] sm:$0xff]
        %v1112 = vld [vmem:[%s1096 + $0x78] sm:$0xff]
        %v1113 = vld [vmem:[%s1096 + $0x80] sm:$0xff]
        %v1114 = vld [vmem:[%s1096 + $0x88] sm:$0xff]
        %v1115 = vld [vmem:[%s1096 + $0x90] sm:$0xff]
        %v1116 = vld [vmem:[%s1096 + $0x98] sm:$0xff]
        %v1117 = vld [vmem:[%s1096 + $0xa0] sm:$0xff]
        %v1118 = vld [vmem:[%s1096 + $0xa8] sm:$0xff]
        %v1119 = vld [vmem:[%s1096 + $0xb0] sm:$0xff]
        %v1120 = vld [vmem:[%s1096 + $0xb8] sm:$0xff]
        %v1121 = vld [vmem:[%s1096 + $0xc0] sm:$0xff]
        %v1122 = vld [vmem:[%s1096 + $0xc8] sm:$0xff]
        %v1123 = vld [vmem:[%s1096 + $0xd0] sm:$0xff]
        %v1124 = vld [vmem:[%s1096 + $0xd8] sm:$0xff]
        %v1125 = vld [vmem:[%s1096 + $0xe0] sm:$0xff]
        %v1126 = vld [vmem:[%s1096 + $0xe8] sm:$0xff]
        %v1127 = vld [vmem:[%s1096 + $0xf0] sm:$0xff]
        %v1128 = vld [vmem:[%s1096 + $0xf8] sm:$0xff]
        %v1129 = vld [vmem:[%s1096 + $0x100] sm:$0xff]
        %v1130 = vld [vmem:[%s1096 + $0x108] sm:$0xff]
        %v1131 = vld [vmem:[%s1096 + $0x110] sm:$0xff]
        %v1132 = vld [vmem:[%s1096 + $0x118] sm:$0xff]
        %vm1133 = vcmp.eq.f32.partialorder %v1097, 1.0
        %vm1134 = vcmp.eq.f32.partialorder %v1098, 1.0
        %vm1135 = vcmp.eq.f32.partialorder %v1099, 1.0
        %vm1136 = vcmp.eq.f32.partialorder %v1100, 1.0
        %vm1137 = vcmp.eq.f32.partialorder %v1101, 1.0
        %vm1138 = vcmp.eq.f32.partialorder %v1102, 1.0
        %vm1139 = vcmp.eq.f32.partialorder %v1103, 1.0
        %vm1140 = vcmp.eq.f32.partialorder %v1104, 1.0
        %vm1141 = vcmp.eq.f32.partialorder %v1105, 1.0
        %vm1142 = vcmp.eq.f32.partialorder %v1106, 1.0
        %vm1143 = vcmp.eq.f32.partialorder %v1107, 1.0
        %vm1144 = vcmp.eq.f32.partialorder %v1108, 1.0
        %vm1145 = vcmp.eq.f32.partialorder %v1109, 1.0
        %vm1146 = vcmp.eq.f32.partialorder %v1110, 1.0
        %vm1147 = vcmp.eq.f32.partialorder %v1111, 1.0
        %vm1148 = vcmp.eq.f32.partialorder %v1112, 1.0
        %vm1149 = vcmp.eq.f32.partialorder %v1113, 1.0
        %vm1150 = vcmp.eq.f32.partialorder %v1114, 1.0
        %vm1151 = vcmp.eq.f32.partialorder %v1115, 1.0
        %vm1152 = vcmp.eq.f32.partialorder %v1116, 1.0
        %vm1153 = vcmp.eq.f32.partialorder %v1117, 1.0
        %vm1154 = vcmp.eq.f32.partialorder %v1118, 1.0
        %vm1155 = vcmp.eq.f32.partialorder %v1119, 1.0
        %vm1156 = vcmp.eq.f32.partialorder %v1120, 1.0
        %vm1157 = vcmp.eq.f32.partialorder %v1121, 1.0
        %vm1158 = vcmp.eq.f32.partialorder %v1122, 1.0
        %vm1159 = vcmp.eq.f32.partialorder %v1123, 1.0
        %vm1160 = vcmp.eq.f32.partialorder %v1124, 1.0
        %vm1161 = vcmp.eq.f32.partialorder %v1125, 1.0
        %vm1162 = vcmp.eq.f32.partialorder %v1126, 1.0
        %vm1163 = vcmp.eq.f32.partialorder %v1127, 1.0
        %vm1164 = vcmp.eq.f32.partialorder %v1128, 1.0
        %vm1165 = vcmp.eq.f32.partialorder %v1129, 1.0
        %vm1166 = vcmp.eq.f32.partialorder %v1130, 1.0
        %vm1167 = vcmp.eq.f32.partialorder %v1131, 1.0
        %vm1168 = vcmp.eq.f32.partialorder %v1132, 1.0
        %v1169 = vsub.f32 1.0, %v1060
        %v1170 = vsub.f32 1.0, %v1061
        %v1171 = vsub.f32 1.0, %v1062
        %v1172 = vsub.f32 1.0, %v1063
        %v1173 = vsub.f32 1.0, %v1064
        %v1174 = vsub.f32 1.0, %v1065
        %v1175 = vsub.f32 1.0, %v1066
        %v1176 = vsub.f32 1.0, %v1067
        %v1177 = vsub.f32 1.0, %v1068
        %v1178 = vsub.f32 1.0, %v1069
        %v1179 = vsub.f32 1.0, %v1070
        %v1180 = vsub.f32 1.0, %v1071
        %v1181 = vsub.f32 1.0, %v1072
        %v1182 = vsub.f32 1.0, %v1073
        %v1183 = vsub.f32 1.0, %v1074
        %v1184 = vsub.f32 1.0, %v1075
        %v1185 = vsub.f32 1.0, %v1076
        %v1186 = vsub.f32 1.0, %v1077
        %v1187 = vsub.f32 1.0, %v1078
        %v1188 = vsub.f32 1.0, %v1079
        %v1189 = vsub.f32 1.0, %v1080
        %v1190 = vsub.f32 1.0, %v1081
        %v1191 = vsub.f32 1.0, %v1082
        %v1192 = vsub.f32 1.0, %v1083
        %v1193 = vsub.f32 1.0, %v1084
        %v1194 = vsub.f32 1.0, %v1085
        %v1195 = vsub.f32 1.0, %v1086
        %v1196 = vsub.f32 1.0, %v1087
        %v1197 = vsub.f32 1.0, %v1088
        %v1198 = vsub.f32 1.0, %v1089
        %v1199 = vsub.f32 1.0, %v1090
        %v1200 = vsub.f32 1.0, %v1091
        %v1201 = vsub.f32 1.0, %v1092
        %v1202 = vsub.f32 1.0, %v1093
        %v1203 = vsub.f32 1.0, %v1094
        %v1204 = vsub.f32 1.0, %v1095
        %v1205 = vsel %vm1133, %v1060, %v1169
        %v1206 = vsel %vm1134, %v1061, %v1170
        %v1207 = vsel %vm1135, %v1062, %v1171
        %v1208 = vsel %vm1136, %v1063, %v1172
        %v1209 = vsel %vm1137, %v1064, %v1173
        %v1210 = vsel %vm1138, %v1065, %v1174
        %v1211 = vsel %vm1139, %v1066, %v1175
        %v1212 = vsel %vm1140, %v1067, %v1176
        %v1213 = vsel %vm1141, %v1068, %v1177
        %v1214 = vsel %vm1142, %v1069, %v1178
        %v1215 = vsel %vm1143, %v1070, %v1179
        %v1216 = vsel %vm1144, %v1071, %v1180
        %v1217 = vsel %vm1145, %v1072, %v1181
        %v1218 = vsel %vm1146, %v1073, %v1182
        %v1219 = vsel %vm1147, %v1074, %v1183
        %v1220 = vsel %vm1148, %v1075, %v1184
        %v1221 = vsel %vm1149, %v1076, %v1185
        %v1222 = vsel %vm1150, %v1077, %v1186
        %v1223 = vsel %vm1151, %v1078, %v1187
        %v1224 = vsel %vm1152, %v1079, %v1188
        %v1225 = vsel %vm1153, %v1080, %v1189
        %v1226 = vsel %vm1154, %v1081, %v1190
        %v1227 = vsel %vm1155, %v1082, %v1191
        %v1228 = vsel %vm1156, %v1083, %v1192
        %v1229 = vsel %vm1157, %v1084, %v1193
        %v1230 = vsel %vm1158, %v1085, %v1194
        %v1231 = vsel %vm1159, %v1086, %v1195
        %v1232 = vsel %vm1160, %v1087, %v1196
        %v1233 = vsel %vm1161, %v1088, %v1197
        %v1234 = vsel %vm1162, %v1089, %v1198
        %v1235 = vsel %vm1163, %v1090, %v1199
        %v1236 = vsel %vm1164, %v1091, %v1200
        %v1237 = vsel %vm1165, %v1092, %v1201
        %v1238 = vsel %vm1166, %v1093, %v1202
        %v1239 = vsel %vm1167, %v1094, %v1203
        %v1240 = vsel %vm1168, %v1095, %v1204
        %v1241 = vlog2.pop %v1205
        %v1242 = vmul.f32 %v1241, 0.6931472
        %v1243 = vlog2.pop %v1206
        %v1244 = vmul.f32 %v1243, 0.6931472
        %v1245 = vlog2.pop %v1207
        %v1246 = vmul.f32 %v1245, 0.6931472
        %v1247 = vlog2.pop %v1208
        %v1248 = vmul.f32 %v1247, 0.6931472
        %v1249 = vlog2.pop %v1209
        %v1250 = vmul.f32 %v1249, 0.6931472
        %v1251 = vlog2.pop %v1210
        %v1252 = vmul.f32 %v1251, 0.6931472
        %v1253 = vlog2.pop %v1211
        %v1254 = vmul.f32 %v1253, 0.6931472
        %v1255 = vlog2.pop %v1212
        %v1256 = vmul.f32 %v1255, 0.6931472
        %v1257 = vlog2.pop %v1213
        %v1258 = vmul.f32 %v1257, 0.6931472
        %v1259 = vlog2.pop %v1214
        %v1260 = vmul.f32 %v1259, 0.6931472
        %v1261 = vlog2.pop %v1215
        %v1262 = vmul.f32 %v1261, 0.6931472
        %v1263 = vlog2.pop %v1216
        %v1264 = vmul.f32 %v1263, 0.6931472
        %v1265 = vlog2.pop %v1217
        %v1266 = vmul.f32 %v1265, 0.6931472
        %v1267 = vlog2.pop %v1218
        %v1268 = vmul.f32 %v1267, 0.6931472
        %v1269 = vlog2.pop %v1219
        %v1270 = vmul.f32 %v1269, 0.6931472
        %v1271 = vlog2.pop %v1220
        %v1272 = vmul.f32 %v1271, 0.6931472
        %v1273 = vlog2.pop %v1221
        %v1274 = vmul.f32 %v1273, 0.6931472
        %v1275 = vlog2.pop %v1222
        %v1276 = vmul.f32 %v1275, 0.6931472
        %v1277 = vlog2.pop %v1223
        %v1278 = vmul.f32 %v1277, 0.6931472
        %v1279 = vlog2.pop %v1224
        %v1280 = vmul.f32 %v1279, 0.6931472
        %v1281 = vlog2.pop %v1225
        %v1282 = vmul.f32 %v1281, 0.6931472
        %v1283 = vlog2.pop %v1226
        %v1284 = vmul.f32 %v1283, 0.6931472
        %v1285 = vlog2.pop %v1227
        %v1286 = vmul.f32 %v1285, 0.6931472
        %v1287 = vlog2.pop %v1228
        %v1288 = vmul.f32 %v1287, 0.6931472
        %v1289 = vlog2.pop %v1229
        %v1290 = vmul.f32 %v1289, 0.6931472
        %v1291 = vlog2.pop %v1230
        %v1292 = vmul.f32 %v1291, 0.6931472
        %v1293 = vlog2.pop %v1231
        %v1294 = vmul.f32 %v1293, 0.6931472
        %v1295 = vlog2.pop %v1232
        %v1296 = vmul.f32 %v1295, 0.6931472
        %v1297 = vlog2.pop %v1233
        %v1298 = vmul.f32 %v1297, 0.6931472
        %v1299 = vlog2.pop %v1234
        %v1300 = vmul.f32 %v1299, 0.6931472
        %v1301 = vlog2.pop %v1235
        %v1302 = vmul.f32 %v1301, 0.6931472
        %v1303 = vlog2.pop %v1236
        %v1304 = vmul.f32 %v1303, 0.6931472
        %v1305 = vlog2.pop %v1237
        %v1306 = vmul.f32 %v1305, 0.6931472
        %v1307 = vlog2.pop %v1238
        %v1308 = vmul.f32 %v1307, 0.6931472
        %v1309 = vlog2.pop %v1239
        %v1310 = vmul.f32 %v1309, 0.6931472
        %v1311 = vlog2.pop %v1240
        %v1312 = vmul.f32 %v1311, 0.6931472
        %v1313 = vmul.f32 %v1169, %v1169
        %v1314 = vmul.f32 %v1170, %v1170
        %v1315 = vmul.f32 %v1171, %v1171
        %v1316 = vmul.f32 %v1172, %v1172
        %v1317 = vmul.f32 %v1173, %v1173
        %v1318 = vmul.f32 %v1174, %v1174
        %v1319 = vmul.f32 %v1175, %v1175
        %v1320 = vmul.f32 %v1176, %v1176
        %v1321 = vmul.f32 %v1177, %v1177
        %v1322 = vmul.f32 %v1178, %v1178
        %v1323 = vmul.f32 %v1179, %v1179
        %v1324 = vmul.f32 %v1180, %v1180
        %v1325 = vmul.f32 %v1181, %v1181
        %v1326 = vmul.f32 %v1182, %v1182
        %v1327 = vmul.f32 %v1183, %v1183
        %v1328 = vmul.f32 %v1184, %v1184
        %v1329 = vmul.f32 %v1185, %v1185
        %v1330 = vmul.f32 %v1186, %v1186
        %v1331 = vmul.f32 %v1187, %v1187
        %v1332 = vmul.f32 %v1188, %v1188
        %v1333 = vmul.f32 %v1189, %v1189
        %v1334 = vmul.f32 %v1190, %v1190
        %v1335 = vmul.f32 %v1191, %v1191
        %v1336 = vmul.f32 %v1192, %v1192
        %v1337 = vmul.f32 %v1193, %v1193
        %v1338 = vmul.f32 %v1194, %v1194
        %v1339 = vmul.f32 %v1195, %v1195
        %v1340 = vmul.f32 %v1196, %v1196
        %v1341 = vmul.f32 %v1197, %v1197
        %v1342 = vmul.f32 %v1198, %v1198
        %v1343 = vmul.f32 %v1199, %v1199
        %v1344 = vmul.f32 %v1200, %v1200
        %v1345 = vmul.f32 %v1201, %v1201
        %v1346 = vmul.f32 %v1202, %v1202
        %v1347 = vmul.f32 %v1203, %v1203
        %v1348 = vmul.f32 %v1204, %v1204
        %v1349 = vmul.f32 %v1060, %v1060
        %v1350 = vmul.f32 %v1061, %v1061
        %v1351 = vmul.f32 %v1062, %v1062
        %v1352 = vmul.f32 %v1063, %v1063
        %v1353 = vmul.f32 %v1064, %v1064
        %v1354 = vmul.f32 %v1065, %v1065
        %v1355 = vmul.f32 %v1066, %v1066
        %v1356 = vmul.f32 %v1067, %v1067
        %v1357 = vmul.f32 %v1068, %v1068
        %v1358 = vmul.f32 %v1069, %v1069
        %v1359 = vmul.f32 %v1070, %v1070
        %v1360 = vmul.f32 %v1071, %v1071
        %v1361 = vmul.f32 %v1072, %v1072
        %v1362 = vmul.f32 %v1073, %v1073
        %v1363 = vmul.f32 %v1074, %v1074
        %v1364 = vmul.f32 %v1075, %v1075
        %v1365 = vmul.f32 %v1076, %v1076
        %v1366 = vmul.f32 %v1077, %v1077
        %v1367 = vmul.f32 %v1078, %v1078
        %v1368 = vmul.f32 %v1079, %v1079
        %v1369 = vmul.f32 %v1080, %v1080
        %v1370 = vmul.f32 %v1081, %v1081
        %v1371 = vmul.f32 %v1082, %v1082
        %v1372 = vmul.f32 %v1083, %v1083
        %v1373 = vmul.f32 %v1084, %v1084
        %v1374 = vmul.f32 %v1085, %v1085
        %v1375 = vmul.f32 %v1086, %v1086
        %v1376 = vmul.f32 %v1087, %v1087
        %v1377 = vmul.f32 %v1088, %v1088
        %v1378 = vmul.f32 %v1089, %v1089
        %v1379 = vmul.f32 %v1090, %v1090
        %v1380 = vmul.f32 %v1091, %v1091
        %v1381 = vmul.f32 %v1092, %v1092
        %v1382 = vmul.f32 %v1093, %v1093
        %v1383 = vmul.f32 %v1094, %v1094
        %v1384 = vmul.f32 %v1095, %v1095
        %v1385 = vsub.f32 1.0, %v1097
        %v1386 = vsub.f32 1.0, %v1098
        %v1387 = vsub.f32 1.0, %v1099
        %v1388 = vsub.f32 1.0, %v1100
        %v1389 = vsub.f32 1.0, %v1101
        %v1390 = vsub.f32 1.0, %v1102
        %v1391 = vsub.f32 1.0, %v1103
        %v1392 = vsub.f32 1.0, %v1104
        %v1393 = vsub.f32 1.0, %v1105
        %v1394 = vsub.f32 1.0, %v1106
        %v1395 = vsub.f32 1.0, %v1107
        %v1396 = vsub.f32 1.0, %v1108
        %v1397 = vsub.f32 1.0, %v1109
        %v1398 = vsub.f32 1.0, %v1110
        %v1399 = vsub.f32 1.0, %v1111
        %v1400 = vsub.f32 1.0, %v1112
        %v1401 = vsub.f32 1.0, %v1113
        %v1402 = vsub.f32 1.0, %v1114
        %v1403 = vsub.f32 1.0, %v1115
        %v1404 = vsub.f32 1.0, %v1116
        %v1405 = vsub.f32 1.0, %v1117
        %v1406 = vsub.f32 1.0, %v1118
        %v1407 = vsub.f32 1.0, %v1119
        %v1408 = vsub.f32 1.0, %v1120
        %v1409 = vsub.f32 1.0, %v1121
        %v1410 = vsub.f32 1.0, %v1122
        %v1411 = vsub.f32 1.0, %v1123
        %v1412 = vsub.f32 1.0, %v1124
        %v1413 = vsub.f32 1.0, %v1125
        %v1414 = vsub.f32 1.0, %v1126
        %v1415 = vsub.f32 1.0, %v1127
        %v1416 = vsub.f32 1.0, %v1128
        %v1417 = vsub.f32 1.0, %v1129
        %v1418 = vsub.f32 1.0, %v1130
        %v1419 = vsub.f32 1.0, %v1131
        %v1420 = vsub.f32 1.0, %v1132
        %v1421 = vmul.f32 %v1385, %v1385
        %v1422 = vmul.f32 %v1386, %v1386
        %v1423 = vmul.f32 %v1387, %v1387
        %v1424 = vmul.f32 %v1388, %v1388
        %v1425 = vmul.f32 %v1389, %v1389
        %v1426 = vmul.f32 %v1390, %v1390
        %v1427 = vmul.f32 %v1391, %v1391
        %v1428 = vmul.f32 %v1392, %v1392
        %v1429 = vmul.f32 %v1393, %v1393
        %v1430 = vmul.f32 %v1394, %v1394
        %v1431 = vmul.f32 %v1395, %v1395
        %v1432 = vmul.f32 %v1396, %v1396
        %v1433 = vmul.f32 %v1397, %v1397
        %v1434 = vmul.f32 %v1398, %v1398
        %v1435 = vmul.f32 %v1399, %v1399
        %v1436 = vmul.f32 %v1400, %v1400
        %v1437 = vmul.f32 %v1401, %v1401
        %v1438 = vmul.f32 %v1402, %v1402
        %v1439 = vmul.f32 %v1403, %v1403
        %v1440 = vmul.f32 %v1404, %v1404
        %v1441 = vmul.f32 %v1405, %v1405
        %v1442 = vmul.f32 %v1406, %v1406
        %v1443 = vmul.f32 %v1407, %v1407
        %v1444 = vmul.f32 %v1408, %v1408
        %v1445 = vmul.f32 %v1409, %v1409
        %v1446 = vmul.f32 %v1410, %v1410
        %v1447 = vmul.f32 %v1411, %v1411
        %v1448 = vmul.f32 %v1412, %v1412
        %v1449 = vmul.f32 %v1413, %v1413
        %v1450 = vmul.f32 %v1414, %v1414
        %v1451 = vmul.f32 %v1415, %v1415
        %v1452 = vmul.f32 %v1416, %v1416
        %v1453 = vmul.f32 %v1417, %v1417
        %v1454 = vmul.f32 %v1418, %v1418
        %v1455 = vmul.f32 %v1419, %v1419
        %v1456 = vmul.f32 %v1420, %v1420
        %v1457 = vmul.f32 %v1421, %v1421
        %v1458 = vmul.f32 %v1422, %v1422
        %v1459 = vmul.f32 %v1423, %v1423
        %v1460 = vmul.f32 %v1424, %v1424
        %v1461 = vmul.f32 %v1425, %v1425
        %v1462 = vmul.f32 %v1426, %v1426
        %v1463 = vmul.f32 %v1427, %v1427
        %v1464 = vmul.f32 %v1428, %v1428
        %v1465 = vmul.f32 %v1429, %v1429
        %v1466 = vmul.f32 %v1430, %v1430
        %v1467 = vmul.f32 %v1431, %v1431
        %v1468 = vmul.f32 %v1432, %v1432
        %v1469 = vmul.f32 %v1433, %v1433
        %v1470 = vmul.f32 %v1434, %v1434
        %v1471 = vmul.f32 %v1435, %v1435
        %v1472 = vmul.f32 %v1436, %v1436
        %v1473 = vmul.f32 %v1437, %v1437
        %v1474 = vmul.f32 %v1438, %v1438
        %v1475 = vmul.f32 %v1439, %v1439
        %v1476 = vmul.f32 %v1440, %v1440
        %v1477 = vmul.f32 %v1441, %v1441
        %v1478 = vmul.f32 %v1442, %v1442
        %v1479 = vmul.f32 %v1443, %v1443
        %v1480 = vmul.f32 %v1444, %v1444
        %v1481 = vmul.f32 %v1445, %v1445
        %v1482 = vmul.f32 %v1446, %v1446
        %v1483 = vmul.f32 %v1447, %v1447
        %v1484 = vmul.f32 %v1448, %v1448
        %v1485 = vmul.f32 %v1449, %v1449
        %v1486 = vmul.f32 %v1450, %v1450
        %v1487 = vmul.f32 %v1451, %v1451
        %v1488 = vmul.f32 %v1452, %v1452
        %v1489 = vmul.f32 %v1453, %v1453
        %v1490 = vmul.f32 %v1454, %v1454
        %v1491 = vmul.f32 %v1455, %v1455
        %v1492 = vmul.f32 %v1456, %v1456
        %v1493 = vmul.f32 %v1349, %v1457
        %v1494 = vmul.f32 %v1350, %v1458
        %v1495 = vmul.f32 %v1351, %v1459
        %v1496 = vmul.f32 %v1352, %v1460
        %v1497 = vmul.f32 %v1353, %v1461
        %v1498 = vmul.f32 %v1354, %v1462
        %v1499 = vmul.f32 %v1355, %v1463
        %v1500 = vmul.f32 %v1356, %v1464
        %v1501 = vmul.f32 %v1357, %v1465
        %v1502 = vmul.f32 %v1358, %v1466
        %v1503 = vmul.f32 %v1359, %v1467
        %v1504 = vmul.f32 %v1360, %v1468
        %v1505 = vmul.f32 %v1361, %v1469
        %v1506 = vmul.f32 %v1362, %v1470
        %v1507 = vmul.f32 %v1363, %v1471
        %v1508 = vmul.f32 %v1364, %v1472
        %v1509 = vmul.f32 %v1365, %v1473
        %v1510 = vmul.f32 %v1366, %v1474
        %v1511 = vmul.f32 %v1367, %v1475
        %v1512 = vmul.f32 %v1368, %v1476
        %v1513 = vmul.f32 %v1369, %v1477
        %v1514 = vmul.f32 %v1370, %v1478
        %v1515 = vmul.f32 %v1371, %v1479
        %v1516 = vmul.f32 %v1372, %v1480
        %v1517 = vmul.f32 %v1373, %v1481
        %v1518 = vmul.f32 %v1374, %v1482
        %v1519 = vmul.f32 %v1375, %v1483
        %v1520 = vmul.f32 %v1376, %v1484
        %v1521 = vmul.f32 %v1377, %v1485
        %v1522 = vmul.f32 %v1378, %v1486
        %v1523 = vmul.f32 %v1379, %v1487
        %v1524 = vmul.f32 %v1380, %v1488
        %v1525 = vmul.f32 %v1381, %v1489
        %v1526 = vmul.f32 %v1382, %v1490
        %v1527 = vmul.f32 %v1383, %v1491
        %v1528 = vmul.f32 %v1384, %v1492
        %v1529 = vsel %vm1133, %v1313, %v1493
        %v1530 = vsel %vm1134, %v1314, %v1494
        %v1531 = vsel %vm1135, %v1315, %v1495
        %v1532 = vsel %vm1136, %v1316, %v1496
        %v1533 = vsel %vm1137, %v1317, %v1497
        %v1534 = vsel %vm1138, %v1318, %v1498
        %v1535 = vsel %vm1139, %v1319, %v1499
        %v1536 = vsel %vm1140, %v1320, %v1500
        %v1537 = vsel %vm1141, %v1321, %v1501
        %v1538 = vsel %vm1142, %v1322, %v1502
        %v1539 = vsel %vm1143, %v1323, %v1503
        %v1540 = vsel %vm1144, %v1324, %v1504
        %v1541 = vsel %vm1145, %v1325, %v1505
        %v1542 = vsel %vm1146, %v1326, %v1506
        %v1543 = vsel %vm1147, %v1327, %v1507
        %v1544 = vsel %vm1148, %v1328, %v1508
        %v1545 = vsel %vm1149, %v1329, %v1509
        %v1546 = vsel %vm1150, %v1330, %v1510
        %v1547 = vsel %vm1151, %v1331, %v1511
        %v1548 = vsel %vm1152, %v1332, %v1512
        %v1549 = vsel %vm1153, %v1333, %v1513
        %v1550 = vsel %vm1154, %v1334, %v1514
        %v1551 = vsel %vm1155, %v1335, %v1515
        %v1552 = vsel %vm1156, %v1336, %v1516
        %v1553 = vsel %vm1157, %v1337, %v1517
        %v1554 = vsel %vm1158, %v1338, %v1518
        %v1555 = vsel %vm1159, %v1339, %v1519
        %v1556 = vsel %vm1160, %v1340, %v1520
        %v1557 = vsel %vm1161, %v1341, %v1521
        %v1558 = vsel %vm1162, %v1342, %v1522
        %v1559 = vsel %vm1163, %v1343, %v1523
        %v1560 = vsel %vm1164, %v1344, %v1524
        %v1561 = vsel %vm1165, %v1345, %v1525
        %v1562 = vsel %vm1166, %v1346, %v1526
        %v1563 = vsel %vm1167, %v1347, %v1527
        %v1564 = vsel %vm1168, %v1348, %v1528
        %vm1565 = vcmp.le.f32.partialorder %v1097, 1.0
        %vm1566 = vcmp.le.f32.partialorder %v1098, 1.0
        %vm1567 = vcmp.le.f32.partialorder %v1099, 1.0
        %vm1568 = vcmp.le.f32.partialorder %v1100, 1.0
        %vm1569 = vcmp.le.f32.partialorder %v1101, 1.0
        %vm1570 = vcmp.le.f32.partialorder %v1102, 1.0
        %vm1571 = vcmp.le.f32.partialorder %v1103, 1.0
        %vm1572 = vcmp.le.f32.partialorder %v1104, 1.0
        %vm1573 = vcmp.le.f32.partialorder %v1105, 1.0
        %vm1574 = vcmp.le.f32.partialorder %v1106, 1.0
        %vm1575 = vcmp.le.f32.partialorder %v1107, 1.0
        %vm1576 = vcmp.le.f32.partialorder %v1108, 1.0
        %vm1577 = vcmp.le.f32.partialorder %v1109, 1.0
        %vm1578 = vcmp.le.f32.partialorder %v1110, 1.0
        %vm1579 = vcmp.le.f32.partialorder %v1111, 1.0
        %vm1580 = vcmp.le.f32.partialorder %v1112, 1.0
        %vm1581 = vcmp.le.f32.partialorder %v1113, 1.0
        %vm1582 = vcmp.le.f32.partialorder %v1114, 1.0
        %vm1583 = vcmp.le.f32.partialorder %v1115, 1.0
        %vm1584 = vcmp.le.f32.partialorder %v1116, 1.0
        %vm1585 = vcmp.le.f32.partialorder %v1117, 1.0
        %vm1586 = vcmp.le.f32.partialorder %v1118, 1.0
        %vm1587 = vcmp.le.f32.partialorder %v1119, 1.0
        %vm1588 = vcmp.le.f32.partialorder %v1120, 1.0
        %vm1589 = vcmp.le.f32.partialorder %v1121, 1.0
        %vm1590 = vcmp.le.f32.partialorder %v1122, 1.0
        %vm1591 = vcmp.le.f32.partialorder %v1123, 1.0
        %vm1592 = vcmp.le.f32.partialorder %v1124, 1.0
        %vm1593 = vcmp.le.f32.partialorder %v1125, 1.0
        %vm1594 = vcmp.le.f32.partialorder %v1126, 1.0
        %vm1595 = vcmp.le.f32.partialorder %v1127, 1.0
        %vm1596 = vcmp.le.f32.partialorder %v1128, 1.0
        %vm1597 = vcmp.le.f32.partialorder %v1129, 1.0
        %vm1598 = vcmp.le.f32.partialorder %v1130, 1.0
        %vm1599 = vcmp.le.f32.partialorder %v1131, 1.0
        %vm1600 = vcmp.le.f32.partialorder %v1132, 1.0
        %v1601 = vsel %vm1565, 1, 0
        %v1602 = vsel %vm1566, 1, 0
        %v1603 = vsel %vm1567, 1, 0
        %v1604 = vsel %vm1568, 1, 0
        %v1605 = vsel %vm1569, 1, 0
        %v1606 = vsel %vm1570, 1, 0
        %v1607 = vsel %vm1571, 1, 0
        %v1608 = vsel %vm1572, 1, 0
        %v1609 = vsel %vm1573, 1, 0
        %v1610 = vsel %vm1574, 1, 0
        %v1611 = vsel %vm1575, 1, 0
        %v1612 = vsel %vm1576, 1, 0
        %v1613 = vsel %vm1577, 1, 0
        %v1614 = vsel %vm1578, 1, 0
        %v1615 = vsel %vm1579, 1, 0
        %v1616 = vsel %vm1580, 1, 0
        %v1617 = vsel %vm1581, 1, 0
        %v1618 = vsel %vm1582, 1, 0
        %v1619 = vsel %vm1583, 1, 0
        %v1620 = vsel %vm1584, 1, 0
        %v1621 = vsel %vm1585, 1, 0
        %v1622 = vsel %vm1586, 1, 0
        %v1623 = vsel %vm1587, 1, 0
        %v1624 = vsel %vm1588, 1, 0
        %v1625 = vsel %vm1589, 1, 0
        %v1626 = vsel %vm1590, 1, 0
        %v1627 = vsel %vm1591, 1, 0
        %v1628 = vsel %vm1592, 1, 0
        %v1629 = vsel %vm1593, 1, 0
        %v1630 = vsel %vm1594, 1, 0
        %v1631 = vsel %vm1595, 1, 0
        %v1632 = vsel %vm1596, 1, 0
        %v1633 = vsel %vm1597, 1, 0
        %v1634 = vsel %vm1598, 1, 0
        %v1635 = vsel %vm1599, 1, 0
        %v1636 = vsel %vm1600, 1, 0
        %v1637 = vcvt.s32.f32 %v1601
        %v1638 = vcvt.s32.f32 %v1602
        %v1639 = vcvt.s32.f32 %v1603
        %v1640 = vcvt.s32.f32 %v1604
        %v1641 = vcvt.s32.f32 %v1605
        %v1642 = vcvt.s32.f32 %v1606
        %v1643 = vcvt.s32.f32 %v1607
        %v1644 = vcvt.s32.f32 %v1608
        %v1645 = vcvt.s32.f32 %v1609
        %v1646 = vcvt.s32.f32 %v1610
        %v1647 = vcvt.s32.f32 %v1611
        %v1648 = vcvt.s32.f32 %v1612
        %v1649 = vcvt.s32.f32 %v1613
        %v1650 = vcvt.s32.f32 %v1614
        %v1651 = vcvt.s32.f32 %v1615
        %v1652 = vcvt.s32.f32 %v1616
        %v1653 = vcvt.s32.f32 %v1617
        %v1654 = vcvt.s32.f32 %v1618
        %v1655 = vcvt.s32.f32 %v1619
        %v1656 = vcvt.s32.f32 %v1620
        %v1657 = vcvt.s32.f32 %v1621
        %v1658 = vcvt.s32.f32 %v1622
        %v1659 = vcvt.s32.f32 %v1623
        %v1660 = vcvt.s32.f32 %v1624
        %v1661 = vcvt.s32.f32 %v1625
        %v1662 = vcvt.s32.f32 %v1626
        %v1663 = vcvt.s32.f32 %v1627
        %v1664 = vcvt.s32.f32 %v1628
        %v1665 = vcvt.s32.f32 %v1629
        %v1666 = vcvt.s32.f32 %v1630
        %v1667 = vcvt.s32.f32 %v1631
        %v1668 = vcvt.s32.f32 %v1632
        %v1669 = vcvt.s32.f32 %v1633
        %v1670 = vcvt.s32.f32 %v1634
        %v1671 = vcvt.s32.f32 %v1635
        %v1672 = vcvt.s32.f32 %v1636
        %v1673 = vsel %vm1133, 1, 0
        %v1674 = vsel %vm1134, 1, 0
        %v1675 = vsel %vm1135, 1, 0
        %v1676 = vsel %vm1136, 1, 0
        %v1677 = vsel %vm1137, 1, 0
        %v1678 = vsel %vm1138, 1, 0
        %v1679 = vsel %vm1139, 1, 0
        %v1680 = vsel %vm1140, 1, 0
        %v1681 = vsel %vm1141, 1, 0
        %v1682 = vsel %vm1142, 1, 0
        %v1683 = vsel %vm1143, 1, 0
        %v1684 = vsel %vm1144, 1, 0
        %v1685 = vsel %vm1145, 1, 0
        %v1686 = vsel %vm1146, 1, 0
        %v1687 = vsel %vm1147, 1, 0
        %v1688 = vsel %vm1148, 1, 0
        %v1689 = vsel %vm1149, 1, 0
        %v1690 = vsel %vm1150, 1, 0
        %v1691 = vsel %vm1151, 1, 0
        %v1692 = vsel %vm1152, 1, 0
        %v1693 = vsel %vm1153, 1, 0
        %v1694 = vsel %vm1154, 1, 0
        %v1695 = vsel %vm1155, 1, 0
        %v1696 = vsel %vm1156, 1, 0
        %v1697 = vsel %vm1157, 1, 0
        %v1698 = vsel %vm1158, 1, 0
        %v1699 = vsel %vm1159, 1, 0
        %v1700 = vsel %vm1160, 1, 0
        %v1701 = vsel %vm1161, 1, 0
        %v1702 = vsel %vm1162, 1, 0
        %v1703 = vsel %vm1163, 1, 0
        %v1704 = vsel %vm1164, 1, 0
        %v1705 = vsel %vm1165, 1, 0
        %v1706 = vsel %vm1166, 1, 0
        %v1707 = vsel %vm1167, 1, 0
        %v1708 = vsel %vm1168, 1, 0
        %v1709 = vcvt.s32.f32 %v1673
        %v1710 = vcvt.s32.f32 %v1674
        %v1711 = vcvt.s32.f32 %v1675
        %v1712 = vcvt.s32.f32 %v1676
        %v1713 = vcvt.s32.f32 %v1677
        %v1714 = vcvt.s32.f32 %v1678
        %v1715 = vcvt.s32.f32 %v1679
        %v1716 = vcvt.s32.f32 %v1680
        %v1717 = vcvt.s32.f32 %v1681
        %v1718 = vcvt.s32.f32 %v1682
        %v1719 = vcvt.s32.f32 %v1683
        %v1720 = vcvt.s32.f32 %v1684
        %v1721 = vcvt.s32.f32 %v1685
        %v1722 = vcvt.s32.f32 %v1686
        %v1723 = vcvt.s32.f32 %v1687
        %v1724 = vcvt.s32.f32 %v1688
        %v1725 = vcvt.s32.f32 %v1689
        %v1726 = vcvt.s32.f32 %v1690
        %v1727 = vcvt.s32.f32 %v1691
        %v1728 = vcvt.s32.f32 %v1692
        %v1729 = vcvt.s32.f32 %v1693
        %v1730 = vcvt.s32.f32 %v1694
        %v1731 = vcvt.s32.f32 %v1695
        %v1732 = vcvt.s32.f32 %v1696
        %v1733 = vcvt.s32.f32 %v1697
        %v1734 = vcvt.s32.f32 %v1698
        %v1735 = vcvt.s32.f32 %v1699
        %v1736 = vcvt.s32.f32 %v1700
        %v1737 = vcvt.s32.f32 %v1701
        %v1738 = vcvt.s32.f32 %v1702
        %v1739 = vcvt.s32.f32 %v1703
        %v1740 = vcvt.s32.f32 %v1704
        %v1741 = vcvt.s32.f32 %v1705
        %v1742 = vcvt.s32.f32 %v1706
        %v1743 = vcvt.s32.f32 %v1707
        %v1744 = vcvt.s32.f32 %v1708
        %v1745 = vmul.f32 %v1242, %v1529
        %v1746 = vmul.f32 %v1244, %v1530
        %v1747 = vmul.f32 %v1246, %v1531
        %v1748 = vmul.f32 %v1248, %v1532
        %v1749 = vmul.f32 %v1250, %v1533
        %v1750 = vmul.f32 %v1252, %v1534
        %v1751 = vmul.f32 %v1254, %v1535
        %v1752 = vmul.f32 %v1256, %v1536
        %v1753 = vmul.f32 %v1258, %v1537
        %v1754 = vmul.f32 %v1260, %v1538
        %v1755 = vmul.f32 %v1262, %v1539
        %v1756 = vmul.f32 %v1264, %v1540
        %v1757 = vmul.f32 %v1266, %v1541
        %v1758 = vmul.f32 %v1268, %v1542
        %v1759 = vmul.f32 %v1270, %v1543
        %v1760 = vmul.f32 %v1272, %v1544
        %v1761 = vmul.f32 %v1274, %v1545
        %v1762 = vmul.f32 %v1276, %v1546
        %v1763 = vmul.f32 %v1278, %v1547
        %v1764 = vmul.f32 %v1280, %v1548
        %v1765 = vmul.f32 %v1282, %v1549
        %v1766 = vmul.f32 %v1284, %v1550
        %v1767 = vmul.f32 %v1286, %v1551
        %v1768 = vmul.f32 %v1288, %v1552
        %v1769 = vmul.f32 %v1290, %v1553
        %v1770 = vmul.f32 %v1292, %v1554
        %v1771 = vmul.f32 %v1294, %v1555
        %v1772 = vmul.f32 %v1296, %v1556
        %v1773 = vmul.f32 %v1298, %v1557
        %v1774 = vmul.f32 %v1300, %v1558
        %v1775 = vmul.f32 %v1302, %v1559
        %v1776 = vmul.f32 %v1304, %v1560
        %v1777 = vmul.f32 %v1306, %v1561
        %v1778 = vmul.f32 %v1308, %v1562
        %v1779 = vmul.f32 %v1310, %v1563
        %v1780 = vmul.f32 %v1312, %v1564
        %v1781 = vmul.f32 %v1745, %v1637
        %v1782 = vmul.f32 %v1746, %v1638
        %v1783 = vmul.f32 %v1747, %v1639
        %v1784 = vmul.f32 %v1748, %v1640
        %v1785 = vmul.f32 %v1749, %v1641
        %v1786 = vmul.f32 %v1750, %v1642
        %v1787 = vmul.f32 %v1751, %v1643
        %v1788 = vmul.f32 %v1752, %v1644
        %v1789 = vmul.f32 %v1753, %v1645
        %v1790 = vmul.f32 %v1754, %v1646
        %v1791 = vmul.f32 %v1755, %v1647
        %v1792 = vmul.f32 %v1756, %v1648
        %v1793 = vmul.f32 %v1757, %v1649
        %v1794 = vmul.f32 %v1758, %v1650
        %v1795 = vmul.f32 %v1759, %v1651
        %v1796 = vmul.f32 %v1760, %v1652
        %v1797 = vmul.f32 %v1761, %v1653
        %v1798 = vmul.f32 %v1762, %v1654
        %v1799 = vmul.f32 %v1763, %v1655
        %v1800 = vmul.f32 %v1764, %v1656
        %v1801 = vmul.f32 %v1765, %v1657
        %v1802 = vmul.f32 %v1766, %v1658
        %v1803 = vmul.f32 %v1767, %v1659
        %v1804 = vmul.f32 %v1768, %v1660
        %v1805 = vmul.f32 %v1769, %v1661
        %v1806 = vmul.f32 %v1770, %v1662
        %v1807 = vmul.f32 %v1771, %v1663
        %v1808 = vmul.f32 %v1772, %v1664
        %v1809 = vmul.f32 %v1773, %v1665
        %v1810 = vmul.f32 %v1774, %v1666
        %v1811 = vmul.f32 %v1775, %v1667
        %v1812 = vmul.f32 %v1776, %v1668
        %v1813 = vmul.f32 %v1777, %v1669
        %v1814 = vmul.f32 %v1778, %v1670
        %v1815 = vmul.f32 %v1779, %v1671
        %v1816 = vmul.f32 %v1780, %v1672
        %v1817 = vadd.f32 %v1781, %v1782
        %v1818 = vadd.f32 %v1817, %v1783
        %v1819 = vadd.f32 %v1818, %v1784
        %v1820 = vadd.f32 %v1819, %v1785
        %v1821 = vadd.f32 %v1820, %v1786
        %v1822 = vadd.f32 %v1821, %v1787
        %v1823 = vadd.f32 %v1822, %v1788
        %v1824 = vadd.f32 %v1823, %v1789
        %v1825 = vadd.f32 %v1824, %v1790
        %v1826 = vadd.f32 %v1825, %v1791
        %v1827 = vadd.f32 %v1826, %v1792
        %v1828 = vadd.f32 %v1827, %v1793
        %v1829 = vadd.f32 %v1828, %v1794
        %v1830 = vadd.f32 %v1829, %v1795
        %v1831 = vadd.f32 %v1830, %v1796
        %v1832 = vadd.f32 %v1831, %v1797
        %v1833 = vadd.f32 %v1832, %v1798
        %v1834 = vadd.f32 %v1833, %v1799
        %v1835 = vadd.f32 %v1834, %v1800
        %v1836 = vadd.f32 %v1835, %v1801
        %v1837 = vadd.f32 %v1836, %v1802
        %v1838 = vadd.f32 %v1837, %v1803
        %v1839 = vadd.f32 %v1838, %v1804
        %v1840 = vadd.f32 %v1839, %v1805
        %v1841 = vadd.f32 %v1840, %v1806
        %v1842 = vadd.f32 %v1841, %v1807
        %v1843 = vadd.f32 %v1842, %v1808
        %v1844 = vadd.f32 %v1843, %v1809
        %v1845 = vadd.f32 %v1844, %v1810
        %v1846 = vadd.f32 %v1845, %v1811
        %v1847 = vadd.f32 %v1846, %v1812
        %v1848 = vadd.f32 %v1847, %v1813
        %v1849 = vadd.f32 %v1848, %v1814
        %v1850 = vadd.f32 %v1849, %v1815
        %v1851 = vadd.f32 %v1850, %v1816
        %v1852 = vadd.f32 %v1022, %v1851
        %v1853 = vadd.f32 %v1709, %v1710
        %v1854 = vadd.f32 %v1853, %v1711
        %v1855 = vadd.f32 %v1854, %v1712
        %v1856 = vadd.f32 %v1855, %v1713
        %v1857 = vadd.f32 %v1856, %v1714
        %v1858 = vadd.f32 %v1857, %v1715
        %v1859 = vadd.f32 %v1858, %v1716
        %v1860 = vadd.f32 %v1859, %v1717
        %v1861 = vadd.f32 %v1860, %v1718
        %v1862 = vadd.f32 %v1861, %v1719
        %v1863 = vadd.f32 %v1862, %v1720
        %v1864 = vadd.f32 %v1863, %v1721
        %v1865 = vadd.f32 %v1864, %v1722
        %v1866 = vadd.f32 %v1865, %v1723
        %v1867 = vadd.f32 %v1866, %v1724
        %v1868 = vadd.f32 %v1867, %v1725
        %v1869 = vadd.f32 %v1868, %v1726
        %v1870 = vadd.f32 %v1869, %v1727
        %v1871 = vadd.f32 %v1870, %v1728
        %v1872 = vadd.f32 %v1871, %v1729
        %v1873 = vadd.f32 %v1872, %v1730
        %v1874 = vadd.f32 %v1873, %v1731
        %v1875 = vadd.f32 %v1874, %v1732
        %v1876 = vadd.f32 %v1875, %v1733
        %v1877 = vadd.f32 %v1876, %v1734
        %v1878 = vadd.f32 %v1877, %v1735
        %v1879 = vadd.f32 %v1878, %v1736
        %v1880 = vadd.f32 %v1879, %v1737
        %v1881 = vadd.f32 %v1880, %v1738
        %v1882 = vadd.f32 %v1881, %v1739
        %v1883 = vadd.f32 %v1882, %v1740
        %v1884 = vadd.f32 %v1883, %v1741
        %v1885 = vadd.f32 %v1884, %v1742
        %v1886 = vadd.f32 %v1885, %v1743
        %v1887 = vadd.f32 %v1886, %v1744
        %v1888 = vadd.f32 %v1058, %v1887
        %v1889 = vld [vmem:[%s219] sm:$0xff]
        %v1890 = vadd.f32 %v1889, %v1852
        %1891 = vst [vmem:[%s219] sm:$0xff] %v1890
        %v1892 = vld [vmem:[%s219 + $0x8] sm:$0xff]
        %v1893 = vadd.f32 %v1892, %v1888
        %1894 = vst [vmem:[%s219 + $0x8] sm:$0xff] %v1893
        %s1895 = sand.u32 %s98, 1
        %s1896 = scalar_lea.sflag [#allocation4], %s1895
        %s1897 = sand.u32 %s98, 1
        %s1898 = smul.addr %s1897, 16
        %s1899 = scalar_lea.vmem [#allocation7], %s1898
        // Predicated region
        $region41: #{tpu_custom_call.1} parent=27 // pred_check
          %p1900 = pneg %p108
        $region42: #{tpu_custom_call.1} parent=27 // pred_check_branch
          %1902 = sbr.rel (%p1900) target = $region44
        $region43: #{tpu_custom_call.1} parent=27 // pred_region
          %s1903 = smul.u32 2, %s26
          %s1905 = ssub.s32 256, 256
          %1906 = vsyncadd %s1896, %s1905
          %s1907 = smul.addr %s1903, 128
          %s1908 = scalar_lea.hbm %s2, %s1907
          %s1909 = sshll.u32 %s1899, 4
          %s1910 = int_to_ptr.vmem [resolvable:$true] %s1909
          %1915 = dma.vmem_to_hbm [thread:$0]  %s1910, 256, %s1908, %s1896, 128, 128, 8
        $region44: #{tpu_custom_call.1} parent=27 // pred_fallthru
          _
      $region28: #{tpu_custom_call.1} parent=5 // pred_fallthru
        _
      %p1916 = scmp.le.s32.totalorder 2, %s17
      // Predicated region
      $region45: #{tpu_custom_call.1} parent=5 // pred_check
        %p1917 = pneg %p1916
      $region46: #{tpu_custom_call.1} parent=5 // pred_check_branch
        %1919 = sbr.rel (%p1917) target = $region48
      $region47: #{tpu_custom_call.1} parent=5 // pred_region
        %s1920 = ssub.s32 %s17, 2
        // Predicated region
        $region49: #{tpu_custom_call.1} parent=47 // pred_check
          %p1921 = pneg %p114
        $region50: #{tpu_custom_call.1} parent=47 // pred_check_branch
          %1923 = sbr.rel (%p1921) target = $region52
        $region51: #{tpu_custom_call.1} parent=47 // pred_region
          %s1924 = sand.u32 %s99, 1
          %s1925 = scalar_lea.sflag [#allocation4], %s1924
          %s1926 = sand.u32 %s99, 1
          %s1927 = smul.addr %s1926, 16
          %s1928 = scalar_lea.vmem [#allocation7], %s1927
          %1929 = dma.done %s1925, 256
        $region52: #{tpu_custom_call.1} parent=47 // pred_fallthru
          _
      $region48: #{tpu_custom_call.1} parent=5 // pred_fallthru
        _
    $region6: #{tpu_custom_call.1} parent=1 // loop_footer
      %s21 = sadd.s32 1, %s17
    $region7: #{tpu_custom_call.1} parent=1 // loop_footer_branch
      %16 = sbr.rel target = $region3
    $region8: #{tpu_custom_call.1} parent=1 // loop_exit
      _
    %1930 = vsyncpa [#allocation3], 1
    %s1931 = scalar_lea.sflag [#allocation3], 1
    %1932 = vsyncpa %s1931, 1
    %1933 = vsyncpa [#allocation6], 1
    %s1934 = scalar_lea.sflag [#allocation6], 1
    %1935 = vsyncpa %s1934, 1
    %1936 = vsyncpa [#allocation4], 1
    %s1937 = scalar_lea.sflag [#allocation4], 1
    %1938 = vsyncpa %s1937, 1

</llo_original>
